<compile_context>
chip_gen: v7x
topology: tpu7x:2x2x1
jax: 0.10.0
libtpu: 0.0.40
codegen_flags: <defaults>
</compile_context>

<pallas_src>
import functools

import jax
import jax.numpy as jnp
from jax.experimental import pallas as pl
from jax.experimental.pallas import tpu as pltpu


# ---------------------------------------------------------------------------
# Small helpers
# ---------------------------------------------------------------------------

def _round_up(v, m):
    return (v + m - 1) // m * m


def _vmem_capacity_bytes():
    """Per-core VMEM capacity; conservative (v7x-sized) fallback if the query fails."""
    try:
        info = pltpu.get_tpu_info()
        cap = int(getattr(info, "vmem_capacity_bytes", 0) or 0)
        if cap > 0:
            return cap
    except Exception:
        pass
    return 64 << 20


def _pick_batch_tile(batch, row_bytes, budget_bytes):
    """Largest MXU-friendly batch tile whose (double-buffered) x+out footprint
    fits the VMEM budget, with bounded padding waste when it doesn't divide B."""
    if batch <= 8:
        return batch
    for t in (512, 256, 128, 64, 32, 16, 8):
        if t > batch:
            continue
        if 4 * t * row_bytes > budget_bytes:
            continue
        if _round_up(batch, t) - batch <= max(batch // 2, 8):
            return t
    return 8


# ---------------------------------------------------------------------------
# Kernels
# ---------------------------------------------------------------------------

def _fused_kernel(gain_ref, nbias_ref,                          # SMEM scalars
                  x_ref, w_ref, b_ref, beta_ref, gamma_ref, omg_ref,
                  o_ref, *, n_partitions, int_dim, matmul_dtype, unrolled):
    """One grid step = one batch tile x ALL partitions (weights VMEM-resident)."""
    g = gain_ref[0]                       # Affine gain (scalar)
    nb = nbias_ref[0]                     # Affine bias (scalar)

    def do_partition(p, off):
        xs = x_ref[:, pl.ds(off, int_dim)]          # (BT, D), lane-aligned slice
        xn = xs * g + nb                            # Affine
        w = w_ref[p]                                # (D, D) weight block
        if matmul_dtype is not None:                # optional bf16 MXU inputs
            y = jnp.dot(xn.astype(matmul_dtype), w.astype(matmul_dtype),
                        preferred_element_type=jnp.float32)
        else:
            y = jnp.dot(xn, w, preferred_element_type=jnp.float32)
        y = y + b_ref[:, pl.ds(off, int_dim)]
        # Supact (f32 epilogue); (1 - gamma) precomputed in the wrapper.
        # TODO(synk): on v5e, consider pl.reciprocal(1+exp(-z), approx=True) to
        # push the divide onto the EUP slot (skipped to keep exact numerics).
        inv = jax.nn.sigmoid(beta_ref[:, pl.ds(off, int_dim)] * y)
        mult = gamma_ref[:, pl.ds(off, int_dim)] + inv * omg_ref[:, pl.ds(off, int_dim)]
        o_ref[:, pl.ds(off, int_dim)] = (mult * y + xs).astype(o_ref.dtype)

    if unrolled:
        # Static-unroll fallback (only taken if fori/dynamic slicing is rejected).
        for p in range(n_partitions):
            do_partition(p, p * int_dim)
    else:
        # fori_loop keeps vreg pressure flat for any P; offsets are 128-aligned.
        def body(p, carry):
            do_partition(p, pl.multiple_of(p * int_dim, 128))
            return carry
        jax.lax.fori_loop(0, n_partitions, body, 0, unroll=2)

    # TODO(synk): when D == 128 and the kernel is MXU-bound on v6e/v7x, pair up
    # partitions into (256,256) block-diagonal tiles to fill the 256-wide MXU.


def _block_kernel(gain_ref, nbias_ref,
                  x_ref, w_ref, b_ref, beta_ref, gamma_ref, omg_ref,
                  o_ref, *, matmul_dtype):
    """Grid (P, batch_tiles): one (D, D) weight block x one batch tile per step."""
    g = gain_ref[0]
    nb = nbias_ref[0]

    xs = x_ref[...]                        # (BT, D) batch-tile slice of x
    xn = xs * g + nb                       # Affine
    w = w_ref[...]                         # (D, D) weight block (leading dim squeezed)
    if matmul_dtype is not None:
        y = jnp.dot(xn.astype(matmul_dtype), w.astype(matmul_dtype),
                    preferred_element_type=jnp.float32)
    else:
        y = jnp.dot(xn, w, preferred_element_type=jnp.float32)
    y = y + b_ref[...]

    inv = jax.nn.sigmoid(beta_ref[...] * y)               # Supact (f32 epilogue)
    mult = gamma_ref[...] + inv * omg_ref[...]
    o_ref[...] = (mult * y + xs).astype(o_ref.dtype)      # residual + explicit cast


# ---------------------------------------------------------------------------
# Wrapper
# ---------------------------------------------------------------------------

def transformer_forward(x, weights, bias, gain, norm_bias, beta, gamma,
                        *, fused=None, matmul_dtype=None):
    """x: (B, in_size); weights: (P, D, D) with P * D == in_size."""
    B, in_size = x.shape
    P, D, D2 = weights.shape
    assert D == D2 and P * D == in_size

    itemsize = jnp.dtype(x.dtype).itemsize
    vmem_cap = _vmem_capacity_bytes()

    # ---- lane-align each partition block (pad D up to a multiple of 128) ----
    Dp = _round_up(D, 128)
    omg = 1.0 - gamma                      # hoisted out of the kernel loop
    if Dp != D:
        pad_d = Dp - D
        w_p = jnp.pad(weights, ((0, 0), (0, pad_d), (0, pad_d)))
        x_p = jnp.pad(x.reshape(B, P, D),
                      ((0, 0), (0, 0), (0, pad_d))).reshape(B, P * Dp)

        def _padv(v):
            return jnp.pad(v.reshape(P, D), ((0, 0), (0, pad_d))).reshape(P * Dp)

        bias_p, beta_p, gamma_p, omg_p = map(_padv, (bias, beta, gamma, omg))
    else:
        w_p, x_p = weights, x
        bias_p, beta_p, gamma_p, omg_p = bias, beta, gamma, omg
    in_p = P * Dp

    # Present per-feature vectors as (1, in_p) so they tile as lane rows.
    b2 = bias_p.reshape(1, in_p)
    beta2 = beta_p.reshape(1, in_p)
    gamma2 = gamma_p.reshape(1, in_p)
    omg2 = omg_p.reshape(1, in_p)

    weight_bytes = P * Dp * Dp * itemsize
    vec_bytes = 4 * in_p * itemsize

    if fused is None:
        # Prefer the fused path (contiguous x reads, weights fetched exactly once)
        # whenever single-buffered residency leaves most of VMEM for batch tiles.
        fused = weight_bytes + vec_bytes <= vmem_cap // 4

    headroom = 4 << 20
    if fused:
        budget = max(vmem_cap - 2 * (weight_bytes + vec_bytes) - headroom, 4 << 20)
        bt = _pick_batch_tile(B, in_p * itemsize, budget)
    else:
        budget = max(vmem_cap - 2 * Dp * Dp * itemsize - headroom, 4 << 20)
        bt = _pick_batch_tile(B, Dp * itemsize, budget)

    # ---- pad the batch so every tile is full (keeps the pipeline fed) ----
    Bp = _round_up(B, bt)
    if Bp != B:
        x_p = jnp.pad(x_p, ((0, Bp - B), (0, 0)))
    nbt = Bp // bt

    smem = pl.BlockSpec(memory_space=pltpu.MemorySpace.SMEM)

    def run(path_fused, use_pm, use_fori):
        if path_fused:
            def const_spec(shape):
                idx = lambda b: (0,) * len(shape)
                if use_pm:
                    # Resident operands: constant index_map -> no double-buffering.
                    return pl.BlockSpec(shape, idx, pipeline_mode=pl.Buffered(1))
                return pl.BlockSpec(shape, idx)

            in_specs = [
                smem,                                             # gain (1,)
                smem,                                             # norm bias (1,)
                pl.BlockSpec((bt, in_p), lambda b: (b, 0)),       # x batch tile
                const_spec((P, Dp, Dp)),                          # all weights (resident)
                const_spec((1, in_p)),                            # bias (resident)
                const_spec((1, in_p)),                            # beta (resident)
                const_spec((1, in_p)),                            # gamma (resident)
                const_spec((1, in_p)),                            # 1 - gamma (resident)
            ]
            out_specs = pl.BlockSpec((bt, in_p), lambda b: (b, 0))
            grid = (nbt,)
            kernel = functools.partial(_fused_kernel, n_partitions=P, int_dim=Dp,
                                       matmul_dtype=matmul_dtype,
                                       unrolled=not use_fori)
            semantics = ("parallel",)
            resident_mult = 1 if use_pm else 2
            est = (4 * bt * in_p * itemsize
                   + resident_mult * (weight_bytes + vec_bytes) + (2 << 20))
        else:
            if use_pm:
                x_spec = pl.BlockSpec((bt, Dp), lambda p, b: (b, p),
                                      pipeline_mode=pl.Buffered(3))
            else:
                x_spec = pl.BlockSpec((bt, Dp), lambda p, b: (b, p))
            in_specs = [
                smem, smem,
                x_spec,                                                        # x tile (strided)
                pl.BlockSpec((pl.Squeezed(), Dp, Dp), lambda p, b: (p, 0, 0)),  # weight block
                pl.BlockSpec((1, Dp), lambda p, b: (0, p)),                    # bias slice
                pl.BlockSpec((1, Dp), lambda p, b: (0, p)),                    # beta slice
                pl.BlockSpec((1, Dp), lambda p, b: (0, p)),                    # gamma slice
                pl.BlockSpec((1, Dp), lambda p, b: (0, p)),                    # 1 - gamma slice
            ]
            out_specs = pl.BlockSpec((bt, Dp), lambda p, b: (b, p))
            grid = (P, nbt)
            kernel = functools.partial(_block_kernel, matmul_dtype=matmul_dtype)
            semantics = ("parallel", "parallel")
            est = (5 * bt * Dp * itemsize + 2 * Dp * Dp * itemsize
                   + 8 * Dp * itemsize + (2 << 20))

        vmem_limit = int(min(max(est, 32 << 20), vmem_cap - (2 << 20)))

        return pl.pallas_call(
            kernel,
            out_shape=jax.ShapeDtypeStruct((Bp, in_p), x.dtype),
            grid_spec=pltpu.PrefetchScalarGridSpec(
                num_scalar_prefetch=0,
                grid=grid,
                in_specs=in_specs,
                out_specs=out_specs,
            ),
            compiler_params=pltpu.CompilerParams(
                dimension_semantics=semantics,
                vmem_limit_bytes=vmem_limit),
        )(gain, norm_bias, x_p, w_p, b2, beta2, gamma2, omg2)

    # Attempt ladder: best-performing variant first, previously-verified
    # static/aligned variants as guaranteed-clean fallbacks.
    if fused:
        attempts = ((True, True, True),     # fused, Buffered(1) residents, fori_loop
                    (True, False, True),    # fused, default buffering, fori_loop
                    (True, False, False),   # fused, static unroll (verified)
                    (False, False, False))  # block path (verified)
    else:
        attempts = ((False, True, False),   # block, Buffered(3) x stream
                    (False, False, False))  # block, default buffering (verified)

    out_p = None
    last_err = None
    for path_fused, use_pm, use_fori in attempts:
        try:
            out_p = run(path_fused, use_pm, use_fori)
            break
        except Exception as err:            # unsupported feature -> next variant
            last_err = err
    if out_p is None:
        raise last_err

    # ---- strip batch / lane padding outside the kernel ----
    out_p = out_p[:B]
    if Dp != D:
        out_p = out_p.reshape(B, P, Dp)[:, :, :D].reshape(B, in_size)
    return out_p


# ---------------------------------------------------------------------------
# Pure-JAX reference (matches the PyTorch forward semantics)
# ---------------------------------------------------------------------------

def transformer_ref(x, weights, bias, gain, norm_bias, beta, gamma):
    P = weights.shape[0]
    mat = jax.scipy.linalg.block_diag(*[weights[i] for i in range(P)])
    x_norm = x * gain + norm_bias                      # Affine
    y = x_norm @ mat + bias
    inv = jax.nn.sigmoid(beta * y)                     # Supact
    mult = gamma + inv * (1.0 - gamma)
    return mult * y + x


if __name__ == "__main__":
    key = jax.random.PRNGKey(0)
    ks = jax.random.split(key, 8)

    # Small shapes consistent with the module: in_size divisible by n_partitions.
    B = 8
    in_size = 256
    P = 2
    D = in_size // P

    # Deterministic synthetic parameter init (shapes from __init__):
    # kaiming_uniform_(a=sqrt(5)) on (P, D, D) => fan_in = D*D, bound = 1/sqrt(fan_in).
    fan_in = D * D
    wbound = 1.0 / jnp.sqrt(jnp.float32(fan_in))
    weights = jax.random.uniform(ks[0], (P, D, D), jnp.float32, -wbound, wbound)
    bias = jax.random.uniform(ks[1], (in_size,), jnp.float32, -wbound, wbound)

    # Affine / Supact params (module defaults are ones/zeros; perturb
    # deterministically so every term of the computation is exercised).
    gain = jnp.full((1,), 1.1, jnp.float32)
    norm_bias = jnp.full((1,), 0.05, jnp.float32)
    gamma = 1.0 + 0.1 * jax.random.normal(ks[2], (in_size,), jnp.float32)
    beta = 0.1 * jax.random.normal(ks[3], (in_size,), jnp.float32)

    x = jax.random.normal(ks[4], (B, in_size), jnp.float32)

    # --- fused path (the natural path at these small shapes) ---
    out = transformer_forward(x, weights, bias, gain, norm_bias, beta, gamma)
    out = jax.block_until_ready(out)
    ref = transformer_ref(x, weights, bias, gain, norm_bias, beta, gamma)
    assert out.shape == (B, in_size)
    assert jnp.allclose(out, ref, atol=1e-5, rtol=1e-5), (
        f"fused path: max abs err {jnp.max(jnp.abs(out - ref))}")

    # --- block path (partition-outermost grid), exercised with a bigger batch ---
    B2 = 128
    x2 = jax.random.normal(ks[5], (B2, in_size), jnp.float32)
    out2 = transformer_forward(x2, weights, bias, gain, norm_bias, beta, gamma,
                               fused=False)
    out2 = jax.block_until_ready(out2)
    ref2 = transformer_ref(x2, weights, bias, gain, norm_bias, beta, gamma)
    assert out2.shape == (B2, in_size)
    assert jnp.allclose(out2, ref2, atol=1e-5, rtol=1e-5), (
        f"block path: max abs err {jnp.max(jnp.abs(out2 - ref2))}")

    # --- lane-padding path (D % 128 != 0) + batch padding (B not a tile multiple) ---
    in3, P3 = 192, 2
    D3 = in3 // P3
    w3 = jax.random.uniform(ks[6], (P3, D3, D3), jnp.float32, -1.0 / D3, 1.0 / D3)
    b3 = jax.random.uniform(ks[7], (in3,), jnp.float32, -0.01, 0.01)
    gamma3 = jnp.full((in3,), 0.9, jnp.float32)
    beta3 = jnp.full((in3,), 0.05, jnp.float32)
    B3 = 20
    x3 = jax.random.normal(jax.random.PRNGKey(1), (B3, in3), jnp.float32)
    out3 = transformer_forward(x3, w3, b3, gain, norm_bias, beta3, gamma3)
    out3 = jax.block_until_ready(out3)
    ref3 = transformer_ref(x3, w3, b3, gain, norm_bias, beta3, gamma3)
    assert out3.shape == (B3, in3)
    assert jnp.allclose(out3, ref3, atol=1e-5, rtol=1e-5), (
        f"padded path: max abs err {jnp.max(jnp.abs(out3 - ref3))}")

    # --- bf16 MXU inputs (opt-in; f32 accumulation + f32 epilogue), loose tolerance ---
    out4 = transformer_forward(x2, weights, bias, gain, norm_bias, beta, gamma,
                               matmul_dtype=jnp.bfloat16)
    out4 = jax.block_until_ready(out4)
    assert jnp.allclose(out4, ref2, atol=2e-2, rtol=2e-2), (
        f"bf16 matmul path: max abs err {jnp.max(jnp.abs(out4 - ref2))}")

    print("KERNEL_OK")
</pallas_src>

<mosaic_0001>
module attributes {stable_mosaic.version = 11 : i64} {
  func.func @_fused_kernel(%arg0: i32, %arg1: memref<1xf32, #tpu.memory_space<smem>>, %arg2: memref<1xf32, #tpu.memory_space<smem>>, %arg3: memref<8x256xf32, #tpu.memory_space<vmem>>, %arg4: memref<2x128x128xf32, #tpu.memory_space<vmem>>, %arg5: memref<1x256xf32, #tpu.memory_space<vmem>>, %arg6: memref<1x256xf32, #tpu.memory_space<vmem>>, %arg7: memref<1x256xf32, #tpu.memory_space<vmem>>, %arg8: memref<1x256xf32, #tpu.memory_space<vmem>>, %arg9: memref<8x256xf32, #tpu.memory_space<vmem>>) attributes {dimension_semantics = [#tpu.dimension_semantics<parallel>], iteration_bounds = array<i64: 1>, scalar_prefetch = 0 : i64, scratch_operands = 0 : i64, tpu.core_type = #tpu.core_type<tc>, window_params = [{transform_indices = @transform_0, window_bounds = array<i64: 1>}, {transform_indices = @transform_1, window_bounds = array<i64: 1>}, {transform_indices = @transform_2, window_bounds = array<i64: 8, 256>}, {pipeline_mode = #tpu.pipeline_mode<synchronous>, transform_indices = @transform_3, window_bounds = array<i64: 2, 128, 128>}, {pipeline_mode = #tpu.pipeline_mode<synchronous>, transform_indices = @transform_4, window_bounds = array<i64: 1, 256>}, {pipeline_mode = #tpu.pipeline_mode<synchronous>, transform_indices = @transform_5, window_bounds = array<i64: 1, 256>}, {pipeline_mode = #tpu.pipeline_mode<synchronous>, transform_indices = @transform_6, window_bounds = array<i64: 1, 256>}, {pipeline_mode = #tpu.pipeline_mode<synchronous>, transform_indices = @transform_7, window_bounds = array<i64: 1, 256>}, {transform_indices = @transform_8, window_bounds = array<i64: 8, 256>}]} {
    %c0 = arith.constant 0 : index
    %0 = memref.load %arg1[%c0] : memref<1xf32, #tpu.memory_space<smem>>
    %c0_0 = arith.constant 0 : index
    %1 = memref.load %arg2[%c0_0] : memref<1xf32, #tpu.memory_space<smem>>
    %c0_i32 = arith.constant 0 : i32
    %c128_i32 = arith.constant 128 : i32
    %2 = arith.muli %c0_i32, %c128_i32 : i32
    %3 = tpu.assume_multiple %2, 128 : i32
    %c0_1 = arith.constant 0 : index
    %4 = arith.index_cast %3 : i32 to index
    %5 = vector.load %arg3[%c0_1, %4] : memref<8x256xf32, #tpu.memory_space<vmem>>, vector<8x128xf32>
    %6 = vector.broadcast %0 : f32 to vector<8x128xf32>
    %7 = arith.mulf %5, %6 : vector<8x128xf32>
    %8 = vector.broadcast %1 : f32 to vector<8x128xf32>
    %9 = arith.addf %7, %8 : vector<8x128xf32>
    %10 = arith.index_cast %c0_i32 : i32 to index
    %c0_2 = arith.constant 0 : index
    %c0_3 = arith.constant 0 : index
    %11 = vector.load %arg4[%10, %c0_2, %c0_3] : memref<2x128x128xf32, #tpu.memory_space<vmem>>, vector<1x128x128xf32>
    %12 = vector.shape_cast %11 : vector<1x128x128xf32> to vector<128x128xf32>
    %cst = arith.constant dense<0.000000e+00> : vector<8x128xf32>
    %13 = tpu.matmul %9, %12, %cst {dimension_numbers = #tpu.dot_dimension_numbers<[1], [0], [0], [1], [0, 0, 1, 1], [], []>} : vector<8x128xf32>, vector<128x128xf32>, vector<8x128xf32> -> vector<8x128xf32>
    %c0_4 = arith.constant 0 : index
    %14 = arith.index_cast %3 : i32 to index
    %15 = vector.load %arg5[%c0_4, %14] : memref<1x256xf32, #tpu.memory_space<vmem>>, vector<1x128xf32>
    %16 = vector.broadcast %15 : vector<1x128xf32> to vector<8x128xf32>
    %17 = arith.addf %13, %16 : vector<8x128xf32>
    %c0_5 = arith.constant 0 : index
    %18 = arith.index_cast %3 : i32 to index
    %19 = vector.load %arg6[%c0_5, %18] : memref<1x256xf32, #tpu.memory_space<vmem>>, vector<1x128xf32>
    %20 = vector.broadcast %19 : vector<1x128xf32> to vector<8x128xf32>
    %21 = arith.mulf %20, %17 : vector<8x128xf32>
    %22 = arith.negf %21 : vector<8x128xf32>
    %23 = math.exp %22 : vector<8x128xf32>
    %cst_6 = arith.constant 1.000000e+00 : f32
    %24 = vector.broadcast %cst_6 : f32 to vector<8x128xf32>
    %25 = arith.addf %24, %23 : vector<8x128xf32>
    %26 = arith.divf %24, %25 : vector<8x128xf32>
    %c0_7 = arith.constant 0 : index
    %27 = arith.index_cast %3 : i32 to index
    %28 = vector.load %arg7[%c0_7, %27] : memref<1x256xf32, #tpu.memory_space<vmem>>, vector<1x128xf32>
    %c0_8 = arith.constant 0 : index
    %29 = arith.index_cast %3 : i32 to index
    %30 = vector.load %arg8[%c0_8, %29] : memref<1x256xf32, #tpu.memory_space<vmem>>, vector<1x128xf32>
    %31 = vector.broadcast %30 : vector<1x128xf32> to vector<8x128xf32>
    %32 = arith.mulf %26, %31 : vector<8x128xf32>
    %33 = vector.broadcast %28 : vector<1x128xf32> to vector<8x128xf32>
    %34 = arith.addf %33, %32 : vector<8x128xf32>
    %35 = arith.mulf %34, %17 : vector<8x128xf32>
    %36 = arith.addf %35, %5 : vector<8x128xf32>
    %c0_9 = arith.constant 0 : index
    %37 = arith.index_cast %3 : i32 to index
    %38 = vector.load %arg9[%c0_9, %37] : memref<8x256xf32, #tpu.memory_space<vmem>>, vector<8x128xf32>
    tpu.vector_store %arg9[%c0_9, %37], %36 {strides = array<i32>} : memref<8x256xf32, #tpu.memory_space<vmem>>, vector<8x128xf32>,
    %c1_i32 = arith.constant 1 : i32
    %c128_i32_10 = arith.constant 128 : i32
    %39 = arith.muli %c1_i32, %c128_i32_10 : i32
    %40 = tpu.assume_multiple %39, 128 : i32
    %c0_11 = arith.constant 0 : index
    %41 = arith.index_cast %40 : i32 to index
    %42 = vector.load %arg3[%c0_11, %41] : memref<8x256xf32, #tpu.memory_space<vmem>>, vector<8x128xf32>
    %43 = vector.broadcast %0 : f32 to vector<8x128xf32>
    %44 = arith.mulf %42, %43 : vector<8x128xf32>
    %45 = vector.broadcast %1 : f32 to vector<8x128xf32>
    %46 = arith.addf %44, %45 : vector<8x128xf32>
    %47 = arith.index_cast %c1_i32 : i32 to index
    %c0_12 = arith.constant 0 : index
    %c0_13 = arith.constant 0 : index
    %48 = vector.load %arg4[%47, %c0_12, %c0_13] : memref<2x128x128xf32, #tpu.memory_space<vmem>>, vector<1x128x128xf32>
    %49 = vector.shape_cast %48 : vector<1x128x128xf32> to vector<128x128xf32>
    %cst_14 = arith.constant dense<0.000000e+00> : vector<8x128xf32>
    %50 = tpu.matmul %46, %49, %cst_14 {dimension_numbers = #tpu.dot_dimension_numbers<[1], [0], [0], [1], [0, 0, 1, 1], [], []>} : vector<8x128xf32>, vector<128x128xf32>, vector<8x128xf32> -> vector<8x128xf32>
    %c0_15 = arith.constant 0 : index
    %51 = arith.index_cast %40 : i32 to index
    %52 = vector.load %arg5[%c0_15, %51] : memref<1x256xf32, #tpu.memory_space<vmem>>, vector<1x128xf32>
    %53 = vector.broadcast %52 : vector<1x128xf32> to vector<8x128xf32>
    %54 = arith.addf %50, %53 : vector<8x128xf32>
    %c0_16 = arith.constant 0 : index
    %55 = arith.index_cast %40 : i32 to index
    %56 = vector.load %arg6[%c0_16, %55] : memref<1x256xf32, #tpu.memory_space<vmem>>, vector<1x128xf32>
    %57 = vector.broadcast %56 : vector<1x128xf32> to vector<8x128xf32>
    %58 = arith.mulf %57, %54 : vector<8x128xf32>
    %59 = arith.negf %58 : vector<8x128xf32>
    %60 = math.exp %59 : vector<8x128xf32>
    %cst_17 = arith.constant 1.000000e+00 : f32
    %61 = vector.broadcast %cst_17 : f32 to vector<8x128xf32>
    %62 = arith.addf %61, %60 : vector<8x128xf32>
    %63 = arith.divf %61, %62 : vector<8x128xf32>
    %c0_18 = arith.constant 0 : index
    %64 = arith.index_cast %40 : i32 to index
    %65 = vector.load %arg7[%c0_18, %64] : memref<1x256xf32, #tpu.memory_space<vmem>>, vector<1x128xf32>
    %c0_19 = arith.constant 0 : index
    %66 = arith.index_cast %40 : i32 to index
    %67 = vector.load %arg8[%c0_19, %66] : memref<1x256xf32, #tpu.memory_space<vmem>>, vector<1x128xf32>
    %68 = vector.broadcast %67 : vector<1x128xf32> to vector<8x128xf32>
    %69 = arith.mulf %63, %68 : vector<8x128xf32>
    %70 = vector.broadcast %65 : vector<1x128xf32> to vector<8x128xf32>
    %71 = arith.addf %70, %69 : vector<8x128xf32>
    %72 = arith.mulf %71, %54 : vector<8x128xf32>
    %73 = arith.addf %72, %42 : vector<8x128xf32>
    %c0_20 = arith.constant 0 : index
    %74 = arith.index_cast %40 : i32 to index
    %75 = vector.load %arg9[%c0_20, %74] : memref<8x256xf32, #tpu.memory_space<vmem>>, vector<8x128xf32>
    tpu.vector_store %arg9[%c0_20, %74], %73 {strides = array<i32>} : memref<8x256xf32, #tpu.memory_space<vmem>>, vector<8x128xf32>,
    %c2_i32 = arith.constant 2 : i32
    return
  }
  func.func @transform_0(%arg0: i32) -> i32 {
    %c0_i32 = arith.constant 0 : i32
    %c0_i32_0 = arith.constant 0 : i32
    return %c0_i32 : i32
  }
  func.func @transform_1(%arg0: i32) -> i32 {
    %c0_i32 = arith.constant 0 : i32
    %c0_i32_0 = arith.constant 0 : i32
    return %c0_i32 : i32
  }
  func.func @transform_2(%arg0: i32) -> (i32, i32) {
    %c0_i32 = arith.constant 0 : i32
    %c0_i32_0 = arith.constant 0 : i32
    return %arg0, %c0_i32 : i32, i32
  }
  func.func @transform_3(%arg0: i32) -> (i32, i32, i32) {
    %c0_i32 = arith.constant 0 : i32
    %c0_i32_0 = arith.constant 0 : i32
    %c0_i32_1 = arith.constant 0 : i32
    %c0_i32_2 = arith.constant 0 : i32
    return %c0_i32, %c0_i32_0, %c0_i32_1 : i32, i32, i32
  }
  func.func @transform_4(%arg0: i32) -> (i32, i32) {
    %c0_i32 = arith.constant 0 : i32
    %c0_i32_0 = arith.constant 0 : i32
    %c0_i32_1 = arith.constant 0 : i32
    return %c0_i32, %c0_i32_0 : i32, i32
  }
  func.func @transform_5(%arg0: i32) -> (i32, i32) {
    %c0_i32 = arith.constant 0 : i32
    %c0_i32_0 = arith.constant 0 : i32
    %c0_i32_1 = arith.constant 0 : i32
    return %c0_i32, %c0_i32_0 : i32, i32
  }
  func.func @transform_6(%arg0: i32) -> (i32, i32) {
    %c0_i32 = arith.constant 0 : i32
    %c0_i32_0 = arith.constant 0 : i32
    %c0_i32_1 = arith.constant 0 : i32
    return %c0_i32, %c0_i32_0 : i32, i32
  }
  func.func @transform_7(%arg0: i32) -> (i32, i32) {
    %c0_i32 = arith.constant 0 : i32
    %c0_i32_0 = arith.constant 0 : i32
    %c0_i32_1 = arith.constant 0 : i32
    return %c0_i32, %c0_i32_0 : i32, i32
  }
  func.func @transform_8(%arg0: i32) -> (i32, i32) {
    %c0_i32 = arith.constant 0 : i32
    %c0_i32_0 = arith.constant 0 : i32
    return %arg0, %c0_i32 : i32, i32
  }
}

module attributes {stable_mosaic.version = 11 : i64} {
  func.func @_fused_kernel(%arg0: i32, %arg1: memref<1xf32, #tpu.memory_space<smem>>, %arg2: memref<1xf32, #tpu.memory_space<smem>>, %arg3: memref<8x256xf32, #tpu.memory_space<vmem>>, %arg4: memref<2x128x128xf32, #tpu.memory_space<vmem>>, %arg5: memref<1x256xf32, #tpu.memory_space<vmem>>, %arg6: memref<1x256xf32, #tpu.memory_space<vmem>>, %arg7: memref<1x256xf32, #tpu.memory_space<vmem>>, %arg8: memref<1x256xf32, #tpu.memory_space<vmem>>, %arg9: memref<8x256xf32, #tpu.memory_space<vmem>>) attributes {dimension_semantics = [#tpu.dimension_semantics<parallel>], iteration_bounds = array<i64: 1>, scalar_prefetch = 0 : i64, scratch_operands = 0 : i64, tpu.core_type = #tpu.core_type<tc>, window_params = [{transform_indices = @transform_0, window_bounds = array<i64: 1>}, {transform_indices = @transform_1, window_bounds = array<i64: 1>}, {transform_indices = @transform_2, window_bounds = array<i64: 8, 256>}, {pipeline_mode = #tpu.pipeline_mode<synchronous>, transform_indices = @transform_3, window_bounds = array<i64: 2, 128, 128>}, {pipeline_mode = #tpu.pipeline_mode<synchronous>, transform_indices = @transform_4, window_bounds = array<i64: 1, 256>}, {pipeline_mode = #tpu.pipeline_mode<synchronous>, transform_indices = @transform_5, window_bounds = array<i64: 1, 256>}, {pipeline_mode = #tpu.pipeline_mode<synchronous>, transform_indices = @transform_6, window_bounds = array<i64: 1, 256>}, {pipeline_mode = #tpu.pipeline_mode<synchronous>, transform_indices = @transform_7, window_bounds = array<i64: 1, 256>}, {transform_indices = @transform_8, window_bounds = array<i64: 8, 256>}]} {
    %c0 = arith.constant 0 : index
    %0 = memref.load %arg1[%c0] : memref<1xf32, #tpu.memory_space<smem>>
    %c0_0 = arith.constant 0 : index
    %1 = memref.load %arg2[%c0_0] : memref<1xf32, #tpu.memory_space<smem>>
    %c0_i32 = arith.constant 0 : i32
    %c128_i32 = arith.constant 128 : i32
    %2 = arith.muli %c0_i32, %c128_i32 : i32
    %3 = tpu.assume_multiple %2, 128 : i32
    %c0_1 = arith.constant 0 : index
    %4 = arith.index_cast %3 : i32 to index
    %5 = vector.load %arg3[%c0_1, %4] : memref<8x256xf32, #tpu.memory_space<vmem>>, vector<8x128xf32>
    %6 = vector.broadcast %0 : f32 to vector<8x128xf32>
    %7 = arith.mulf %5, %6 : vector<8x128xf32>
    %8 = vector.broadcast %1 : f32 to vector<8x128xf32>
    %9 = arith.addf %7, %8 : vector<8x128xf32>
    %10 = arith.index_cast %c0_i32 : i32 to index
    %c0_2 = arith.constant 0 : index
    %c0_3 = arith.constant 0 : index
    %11 = vector.load %arg4[%10, %c0_2, %c0_3] : memref<2x128x128xf32, #tpu.memory_space<vmem>>, vector<1x128x128xf32>
    %12 = vector.shape_cast %11 : vector<1x128x128xf32> to vector<128x128xf32>
    %cst = arith.constant dense<0.000000e+00> : vector<8x128xf32>
    %13 = tpu.matmul %9, %12, %cst {dimension_numbers = #tpu.dot_dimension_numbers<[1], [0], [0], [1], [0, 0, 1, 1], [], []>} : vector<8x128xf32>, vector<128x128xf32>, vector<8x128xf32> -> vector<8x128xf32>
    %c0_4 = arith.constant 0 : index
    %14 = arith.index_cast %3 : i32 to index
    %15 = vector.load %arg5[%c0_4, %14] : memref<1x256xf32, #tpu.memory_space<vmem>>, vector<1x128xf32>
    %16 = vector.broadcast %15 : vector<1x128xf32> to vector<8x128xf32>
    %17 = arith.addf %13, %16 : vector<8x128xf32>
    %c0_5 = arith.constant 0 : index
    %18 = arith.index_cast %3 : i32 to index
    %19 = vector.load %arg6[%c0_5, %18] : memref<1x256xf32, #tpu.memory_space<vmem>>, vector<1x128xf32>
    %20 = vector.broadcast %19 : vector<1x128xf32> to vector<8x128xf32>
    %21 = arith.mulf %20, %17 : vector<8x128xf32>
    %22 = arith.negf %21 : vector<8x128xf32>
    %23 = math.exp %22 : vector<8x128xf32>
    %cst_6 = arith.constant 1.000000e+00 : f32
    %24 = vector.broadcast %cst_6 : f32 to vector<8x128xf32>
    %25 = arith.addf %24, %23 : vector<8x128xf32>
    %26 = arith.divf %24, %25 : vector<8x128xf32>
    %c0_7 = arith.constant 0 : index
    %27 = arith.index_cast %3 : i32 to index
    %28 = vector.load %arg7[%c0_7, %27] : memref<1x256xf32, #tpu.memory_space<vmem>>, vector<1x128xf32>
    %c0_8 = arith.constant 0 : index
    %29 = arith.index_cast %3 : i32 to index
    %30 = vector.load %arg8[%c0_8, %29] : memref<1x256xf32, #tpu.memory_space<vmem>>, vector<1x128xf32>
    %31 = vector.broadcast %30 : vector<1x128xf32> to vector<8x128xf32>
    %32 = arith.mulf %26, %31 : vector<8x128xf32>
    %33 = vector.broadcast %28 : vector<1x128xf32> to vector<8x128xf32>
    %34 = arith.addf %33, %32 : vector<8x128xf32>
    %35 = arith.mulf %34, %17 : vector<8x128xf32>
    %36 = arith.addf %35, %5 : vector<8x128xf32>
    %c0_9 = arith.constant 0 : index
    %37 = arith.index_cast %3 : i32 to index
    %38 = vector.load %arg9[%c0_9, %37] : memref<8x256xf32, #tpu.memory_space<vmem>>, vector<8x128xf32>
    tpu.vector_store %arg9[%c0_9, %37], %36 {strides = array<i32>} : memref<8x256xf32, #tpu.memory_space<vmem>>, vector<8x128xf32>,
    %c1_i32 = arith.constant 1 : i32
    %c128_i32_10 = arith.constant 128 : i32
    %39 = arith.muli %c1_i32, %c128_i32_10 : i32
    %40 = tpu.assume_multiple %39, 128 : i32
    %c0_11 = arith.constant 0 : index
    %41 = arith.index_cast %40 : i32 to index
    %42 = vector.load %arg3[%c0_11, %41] : memref<8x256xf32, #tpu.memory_space<vmem>>, vector<8x128xf32>
    %43 = vector.broadcast %0 : f32 to vector<8x128xf32>
    %44 = arith.mulf %42, %43 : vector<8x128xf32>
    %45 = vector.broadcast %1 : f32 to vector<8x128xf32>
    %46 = arith.addf %44, %45 : vector<8x128xf32>
    %47 = arith.index_cast %c1_i32 : i32 to index
    %c0_12 = arith.constant 0 : index
    %c0_13 = arith.constant 0 : index
    %48 = vector.load %arg4[%47, %c0_12, %c0_13] : memref<2x128x128xf32, #tpu.memory_space<vmem>>, vector<1x128x128xf32>
    %49 = vector.shape_cast %48 : vector<1x128x128xf32> to vector<128x128xf32>
    %cst_14 = arith.constant dense<0.000000e+00> : vector<8x128xf32>
    %50 = tpu.matmul %46, %49, %cst_14 {dimension_numbers = #tpu.dot_dimension_numbers<[1], [0], [0], [1], [0, 0, 1, 1], [], []>} : vector<8x128xf32>, vector<128x128xf32>, vector<8x128xf32> -> vector<8x128xf32>
    %c0_15 = arith.constant 0 : index
    %51 = arith.index_cast %40 : i32 to index
    %52 = vector.load %arg5[%c0_15, %51] : memref<1x256xf32, #tpu.memory_space<vmem>>, vector<1x128xf32>
    %53 = vector.broadcast %52 : vector<1x128xf32> to vector<8x128xf32>
    %54 = arith.addf %50, %53 : vector<8x128xf32>
    %c0_16 = arith.constant 0 : index
    %55 = arith.index_cast %40 : i32 to index
    %56 = vector.load %arg6[%c0_16, %55] : memref<1x256xf32, #tpu.memory_space<vmem>>, vector<1x128xf32>
    %57 = vector.broadcast %56 : vector<1x128xf32> to vector<8x128xf32>
    %58 = arith.mulf %57, %54 : vector<8x128xf32>
    %59 = arith.negf %58 : vector<8x128xf32>
    %60 = math.exp %59 : vector<8x128xf32>
    %cst_17 = arith.constant 1.000000e+00 : f32
    %61 = vector.broadcast %cst_17 : f32 to vector<8x128xf32>
    %62 = arith.addf %61, %60 : vector<8x128xf32>
    %63 = arith.divf %61, %62 : vector<8x128xf32>
    %c0_18 = arith.constant 0 : index
    %64 = arith.index_cast %40 : i32 to index
    %65 = vector.load %arg7[%c0_18, %64] : memref<1x256xf32, #tpu.memory_space<vmem>>, vector<1x128xf32>
    %c0_19 = arith.constant 0 : index
    %66 = arith.index_cast %40 : i32 to index
    %67 = vector.load %arg8[%c0_19, %66] : memref<1x256xf32, #tpu.memory_space<vmem>>, vector<1x128xf32>
    %68 = vector.broadcast %67 : vector<1x128xf32> to vector<8x128xf32>
    %69 = arith.mulf %63, %68 : vector<8x128xf32>
    %70 = vector.broadcast %65 : vector<1x128xf32> to vector<8x128xf32>
    %71 = arith.addf %70, %69 : vector<8x128xf32>
    %72 = arith.mulf %71, %54 : vector<8x128xf32>
    %73 = arith.addf %72, %42 : vector<8x128xf32>
    %c0_20 = arith.constant 0 : index
    %74 = arith.index_cast %40 : i32 to index
    %75 = vector.load %arg9[%c0_20, %74] : memref<8x256xf32, #tpu.memory_space<vmem>>, vector<8x128xf32>
    tpu.vector_store %arg9[%c0_20, %74], %73 {strides = array<i32>} : memref<8x256xf32, #tpu.memory_space<vmem>>, vector<8x128xf32>,
    %c2_i32 = arith.constant 2 : i32
    return
  }
  func.func @transform_0(%arg0: i32) -> i32 {
    %c0_i32 = arith.constant 0 : i32
    %c0_i32_0 = arith.constant 0 : i32
    return %c0_i32 : i32
  }
  func.func @transform_1(%arg0: i32) -> i32 {
    %c0_i32 = arith.constant 0 : i32
    %c0_i32_0 = arith.constant 0 : i32
    return %c0_i32 : i32
  }
  func.func @transform_2(%arg0: i32) -> (i32, i32) {
    %c0_i32 = arith.constant 0 : i32
    %c0_i32_0 = arith.constant 0 : i32
    return %arg0, %c0_i32 : i32, i32
  }
  func.func @transform_3(%arg0: i32) -> (i32, i32, i32) {
    %c0_i32 = arith.constant 0 : i32
    %c0_i32_0 = arith.constant 0 : i32
    %c0_i32_1 = arith.constant 0 : i32
    %c0_i32_2 = arith.constant 0 : i32
    return %c0_i32, %c0_i32_0, %c0_i32_1 : i32, i32, i32
  }
  func.func @transform_4(%arg0: i32) -> (i32, i32) {
    %c0_i32 = arith.constant 0 : i32
    %c0_i32_0 = arith.constant 0 : i32
    %c0_i32_1 = arith.constant 0 : i32
    return %c0_i32, %c0_i32_0 : i32, i32
  }
  func.func @transform_5(%arg0: i32) -> (i32, i32) {
    %c0_i32 = arith.constant 0 : i32
    %c0_i32_0 = arith.constant 0 : i32
    %c0_i32_1 = arith.constant 0 : i32
    return %c0_i32, %c0_i32_0 : i32, i32
  }
  func.func @transform_6(%arg0: i32) -> (i32, i32) {
    %c0_i32 = arith.constant 0 : i32
    %c0_i32_0 = arith.constant 0 : i32
    %c0_i32_1 = arith.constant 0 : i32
    return %c0_i32, %c0_i32_0 : i32, i32
  }
  func.func @transform_7(%arg0: i32) -> (i32, i32) {
    %c0_i32 = arith.constant 0 : i32
    %c0_i32_0 = arith.constant 0 : i32
    %c0_i32_1 = arith.constant 0 : i32
    return %c0_i32, %c0_i32_0 : i32, i32
  }
  func.func @transform_8(%arg0: i32) -> (i32, i32) {
    %c0_i32 = arith.constant 0 : i32
    %c0_i32_0 = arith.constant 0 : i32
    return %arg0, %c0_i32 : i32, i32
  }
}

module attributes {stable_mosaic.version = 11 : i64} {
  func.func @_fused_kernel(%arg0: i32, %arg1: memref<1xf32, #tpu.memory_space<smem>>, %arg2: memref<1xf32, #tpu.memory_space<smem>>, %arg3: memref<8x256xf32, #tpu.memory_space<vmem>>, %arg4: memref<2x128x128xf32, #tpu.memory_space<vmem>>, %arg5: memref<1x256xf32, #tpu.memory_space<vmem>>, %arg6: memref<1x256xf32, #tpu.memory_space<vmem>>, %arg7: memref<1x256xf32, #tpu.memory_space<vmem>>, %arg8: memref<1x256xf32, #tpu.memory_space<vmem>>, %arg9: memref<8x256xf32, #tpu.memory_space<vmem>>) attributes {dimension_semantics = [#tpu.dimension_semantics<parallel>], iteration_bounds = array<i64: 1>, scalar_prefetch = 0 : i64, scratch_operands = 0 : i64, tpu.core_type = #tpu.core_type<tc>, window_params = [{transform_indices = @transform_0, window_bounds = array<i64: 1>}, {transform_indices = @transform_1, window_bounds = array<i64: 1>}, {transform_indices = @transform_2, window_bounds = array<i64: 8, 256>}, {pipeline_mode = #tpu.pipeline_mode<synchronous>, transform_indices = @transform_3, window_bounds = array<i64: 2, 128, 128>}, {pipeline_mode = #tpu.pipeline_mode<synchronous>, transform_indices = @transform_4, window_bounds = array<i64: 1, 256>}, {pipeline_mode = #tpu.pipeline_mode<synchronous>, transform_indices = @transform_5, window_bounds = array<i64: 1, 256>}, {pipeline_mode = #tpu.pipeline_mode<synchronous>, transform_indices = @transform_6, window_bounds = array<i64: 1, 256>}, {pipeline_mode = #tpu.pipeline_mode<synchronous>, transform_indices = @transform_7, window_bounds = array<i64: 1, 256>}, {transform_indices = @transform_8, window_bounds = array<i64: 8, 256>}]} {
    %c0 = arith.constant 0 : index
    %0 = memref.load %arg1[%c0] : memref<1xf32, #tpu.memory_space<smem>>
    %c0_0 = arith.constant 0 : index
    %1 = memref.load %arg2[%c0_0] : memref<1xf32, #tpu.memory_space<smem>>
    %c0_1 = arith.constant 0 : index
    %c0_2 = arith.constant 0 : index
    %2 = vector.load %arg3[%c0_1, %c0_2] : memref<8x256xf32, #tpu.memory_space<vmem>>, vector<8x128xf32>
    %3 = vector.broadcast %0 : f32 to vector<8x128xf32>
    %4 = arith.mulf %2, %3 : vector<8x128xf32>
    %5 = vector.broadcast %1 : f32 to vector<8x128xf32>
    %6 = arith.addf %4, %5 : vector<8x128xf32>
    %c0_3 = arith.constant 0 : index
    %c0_4 = arith.constant 0 : index
    %c0_5 = arith.constant 0 : index
    %7 = vector.load %arg4[%c0_3, %c0_4, %c0_5] : memref<2x128x128xf32, #tpu.memory_space<vmem>>, vector<1x128x128xf32>
    %8 = vector.shape_cast %7 : vector<1x128x128xf32> to vector<128x128xf32>
    %cst = arith.constant dense<0.000000e+00> : vector<8x128xf32>
    %9 = tpu.matmul %6, %8, %cst {dimension_numbers = #tpu.dot_dimension_numbers<[1], [0], [0], [1], [0, 0, 1, 1], [], []>} : vector<8x128xf32>, vector<128x128xf32>, vector<8x128xf32> -> vector<8x128xf32>
    %c0_6 = arith.constant 0 : index
    %c0_7 = arith.constant 0 : index
    %10 = vector.load %arg5[%c0_6, %c0_7] : memref<1x256xf32, #tpu.memory_space<vmem>>, vector<1x128xf32>
    %11 = vector.broadcast %10 : vector<1x128xf32> to vector<8x128xf32>
    %12 = arith.addf %9, %11 : vector<8x128xf32>
    %c0_8 = arith.constant 0 : index
    %c0_9 = arith.constant 0 : index
    %13 = vector.load %arg6[%c0_8, %c0_9] : memref<1x256xf32, #tpu.memory_space<vmem>>, vector<1x128xf32>
    %14 = vector.broadcast %13 : vector<1x128xf32> to vector<8x128xf32>
    %15 = arith.mulf %14, %12 : vector<8x128xf32>
    %16 = arith.negf %15 : vector<8x128xf32>
    %17 = math.exp %16 : vector<8x128xf32>
    %cst_10 = arith.constant 1.000000e+00 : f32
    %18 = vector.broadcast %cst_10 : f32 to vector<8x128xf32>
    %19 = arith.addf %18, %17 : vector<8x128xf32>
    %20 = arith.divf %18, %19 : vector<8x128xf32>
    %c0_11 = arith.constant 0 : index
    %c0_12 = arith.constant 0 : index
    %21 = vector.load %arg7[%c0_11, %c0_12] : memref<1x256xf32, #tpu.memory_space<vmem>>, vector<1x128xf32>
    %c0_13 = arith.constant 0 : index
    %c0_14 = arith.constant 0 : index
    %22 = vector.load %arg8[%c0_13, %c0_14] : memref<1x256xf32, #tpu.memory_space<vmem>>, vector<1x128xf32>
    %23 = vector.broadcast %22 : vector<1x128xf32> to vector<8x128xf32>
    %24 = arith.mulf %20, %23 : vector<8x128xf32>
    %25 = vector.broadcast %21 : vector<1x128xf32> to vector<8x128xf32>
    %26 = arith.addf %25, %24 : vector<8x128xf32>
    %27 = arith.mulf %26, %12 : vector<8x128xf32>
    %28 = arith.addf %27, %2 : vector<8x128xf32>
    %c0_15 = arith.constant 0 : index
    %c0_16 = arith.constant 0 : index
    %29 = vector.load %arg9[%c0_15, %c0_16] : memref<8x256xf32, #tpu.memory_space<vmem>>, vector<8x128xf32>
    tpu.vector_store %arg9[%c0_15, %c0_16], %28 {strides = array<i32>} : memref<8x256xf32, #tpu.memory_space<vmem>>, vector<8x128xf32>,
    %c0_17 = arith.constant 0 : index
    %c128 = arith.constant 128 : index
    %30 = vector.load %arg3[%c0_17, %c128] : memref<8x256xf32, #tpu.memory_space<vmem>>, vector<8x128xf32>
    %31 = vector.broadcast %0 : f32 to vector<8x128xf32>
    %32 = arith.mulf %30, %31 : vector<8x128xf32>
    %33 = vector.broadcast %1 : f32 to vector<8x128xf32>
    %34 = arith.addf %32, %33 : vector<8x128xf32>
    %c1 = arith.constant 1 : index
    %c0_18 = arith.constant 0 : index
    %c0_19 = arith.constant 0 : index
    %35 = vector.load %arg4[%c1, %c0_18, %c0_19] : memref<2x128x128xf32, #tpu.memory_space<vmem>>, vector<1x128x128xf32>
    %36 = vector.shape_cast %35 : vector<1x128x128xf32> to vector<128x128xf32>
    %cst_20 = arith.constant dense<0.000000e+00> : vector<8x128xf32>
    %37 = tpu.matmul %34, %36, %cst_20 {dimension_numbers = #tpu.dot_dimension_numbers<[1], [0], [0], [1], [0, 0, 1, 1], [], []>} : vector<8x128xf32>, vector<128x128xf32>, vector<8x128xf32> -> vector<8x128xf32>
    %c0_21 = arith.constant 0 : index
    %c128_22 = arith.constant 128 : index
    %38 = vector.load %arg5[%c0_21, %c128_22] : memref<1x256xf32, #tpu.memory_space<vmem>>, vector<1x128xf32>
    %39 = vector.broadcast %38 : vector<1x128xf32> to vector<8x128xf32>
    %40 = arith.addf %37, %39 : vector<8x128xf32>
    %c0_23 = arith.constant 0 : index
    %c128_24 = arith.constant 128 : index
    %41 = vector.load %arg6[%c0_23, %c128_24] : memref<1x256xf32, #tpu.memory_space<vmem>>, vector<1x128xf32>
    %42 = vector.broadcast %41 : vector<1x128xf32> to vector<8x128xf32>
    %43 = arith.mulf %42, %40 : vector<8x128xf32>
    %44 = arith.negf %43 : vector<8x128xf32>
    %45 = math.exp %44 : vector<8x128xf32>
    %cst_25 = arith.constant 1.000000e+00 : f32
    %46 = vector.broadcast %cst_25 : f32 to vector<8x128xf32>
    %47 = arith.addf %46, %45 : vector<8x128xf32>
    %48 = arith.divf %46, %47 : vector<8x128xf32>
    %c0_26 = arith.constant 0 : index
    %c128_27 = arith.constant 128 : index
    %49 = vector.load %arg7[%c0_26, %c128_27] : memref<1x256xf32, #tpu.memory_space<vmem>>, vector<1x128xf32>
    %c0_28 = arith.constant 0 : index
    %c128_29 = arith.constant 128 : index
    %50 = vector.load %arg8[%c0_28, %c128_29] : memref<1x256xf32, #tpu.memory_space<vmem>>, vector<1x128xf32>
    %51 = vector.broadcast %50 : vector<1x128xf32> to vector<8x128xf32>
    %52 = arith.mulf %48, %51 : vector<8x128xf32>
    %53 = vector.broadcast %49 : vector<1x128xf32> to vector<8x128xf32>
    %54 = arith.addf %53, %52 : vector<8x128xf32>
    %55 = arith.mulf %54, %40 : vector<8x128xf32>
    %56 = arith.addf %55, %30 : vector<8x128xf32>
    %c0_30 = arith.constant 0 : index
    %c128_31 = arith.constant 128 : index
    %57 = vector.load %arg9[%c0_30, %c128_31] : memref<8x256xf32, #tpu.memory_space<vmem>>, vector<8x128xf32>
    tpu.vector_store %arg9[%c0_30, %c128_31], %56 {strides = array<i32>} : memref<8x256xf32, #tpu.memory_space<vmem>>, vector<8x128xf32>,
    return
  }
  func.func @transform_0(%arg0: i32) -> i32 {
    %c0_i32 = arith.constant 0 : i32
    %c0_i32_0 = arith.constant 0 : i32
    return %c0_i32 : i32
  }
  func.func @transform_1(%arg0: i32) -> i32 {
    %c0_i32 = arith.constant 0 : i32
    %c0_i32_0 = arith.constant 0 : i32
    return %c0_i32 : i32
  }
  func.func @transform_2(%arg0: i32) -> (i32, i32) {
    %c0_i32 = arith.constant 0 : i32
    %c0_i32_0 = arith.constant 0 : i32
    return %arg0, %c0_i32 : i32, i32
  }
  func.func @transform_3(%arg0: i32) -> (i32, i32, i32) {
    %c0_i32 = arith.constant 0 : i32
    %c0_i32_0 = arith.constant 0 : i32
    %c0_i32_1 = arith.constant 0 : i32
    %c0_i32_2 = arith.constant 0 : i32
    return %c0_i32, %c0_i32_0, %c0_i32_1 : i32, i32, i32
  }
  func.func @transform_4(%arg0: i32) -> (i32, i32) {
    %c0_i32 = arith.constant 0 : i32
    %c0_i32_0 = arith.constant 0 : i32
    %c0_i32_1 = arith.constant 0 : i32
    return %c0_i32, %c0_i32_0 : i32, i32
  }
  func.func @transform_5(%arg0: i32) -> (i32, i32) {
    %c0_i32 = arith.constant 0 : i32
    %c0_i32_0 = arith.constant 0 : i32
    %c0_i32_1 = arith.constant 0 : i32
    return %c0_i32, %c0_i32_0 : i32, i32
  }
  func.func @transform_6(%arg0: i32) -> (i32, i32) {
    %c0_i32 = arith.constant 0 : i32
    %c0_i32_0 = arith.constant 0 : i32
    %c0_i32_1 = arith.constant 0 : i32
    return %c0_i32, %c0_i32_0 : i32, i32
  }
  func.func @transform_7(%arg0: i32) -> (i32, i32) {
    %c0_i32 = arith.constant 0 : i32
    %c0_i32_0 = arith.constant 0 : i32
    %c0_i32_1 = arith.constant 0 : i32
    return %c0_i32, %c0_i32_0 : i32, i32
  }
  func.func @transform_8(%arg0: i32) -> (i32, i32) {
    %c0_i32 = arith.constant 0 : i32
    %c0_i32_0 = arith.constant 0 : i32
    return %arg0, %c0_i32 : i32, i32
  }
}

module attributes {stable_mosaic.version = 11 : i64} {
  func.func @_block_kernel(%arg0: i32, %arg1: i32, %arg2: memref<1xf32, #tpu.memory_space<smem>>, %arg3: memref<1xf32, #tpu.memory_space<smem>>, %arg4: memref<8x128xf32, #tpu.memory_space<vmem>>, %arg5: memref<1x128x128xf32, #tpu.memory_space<vmem>>, %arg6: memref<1x128xf32, #tpu.memory_space<vmem>>, %arg7: memref<1x128xf32, #tpu.memory_space<vmem>>, %arg8: memref<1x128xf32, #tpu.memory_space<vmem>>, %arg9: memref<1x128xf32, #tpu.memory_space<vmem>>, %arg10: memref<8x128xf32, #tpu.memory_space<vmem>>) attributes {dimension_semantics = [#tpu.dimension_semantics<parallel>, #tpu.dimension_semantics<parallel>], iteration_bounds = array<i64: 2, 1>, scalar_prefetch = 0 : i64, scratch_operands = 0 : i64, tpu.core_type = #tpu.core_type<tc>, window_params = [{transform_indices = @transform_0, window_bounds = array<i64: 1>}, {transform_indices = @transform_1, window_bounds = array<i64: 1>}, {transform_indices = @transform_2, window_bounds = array<i64: 8, 128>}, {transform_indices = @transform_3, window_bounds = array<i64: 1, 128, 128>}, {transform_indices = @transform_4, window_bounds = array<i64: 1, 128>}, {transform_indices = @transform_5, window_bounds = array<i64: 1, 128>}, {transform_indices = @transform_6, window_bounds = array<i64: 1, 128>}, {transform_indices = @transform_7, window_bounds = array<i64: 1, 128>}, {transform_indices = @transform_8, window_bounds = array<i64: 8, 128>}]} {
    %c0 = arith.constant 0 : index
    %0 = memref.load %arg2[%c0] : memref<1xf32, #tpu.memory_space<smem>>
    %c0_0 = arith.constant 0 : index
    %1 = memref.load %arg3[%c0_0] : memref<1xf32, #tpu.memory_space<smem>>
    %c0_1 = arith.constant 0 : index
    %c0_2 = arith.constant 0 : index
    %2 = vector.load %arg4[%c0_1, %c0_2] : memref<8x128xf32, #tpu.memory_space<vmem>>, vector<8x128xf32>
    %3 = vector.broadcast %0 : f32 to vector<8x128xf32>
    %4 = arith.mulf %2, %3 : vector<8x128xf32>
    %5 = vector.broadcast %1 : f32 to vector<8x128xf32>
    %6 = arith.addf %4, %5 : vector<8x128xf32>
    %c0_3 = arith.constant 0 : index
    %c0_4 = arith.constant 0 : index
    %c0_5 = arith.constant 0 : index
    %7 = vector.load %arg5[%c0_3, %c0_4, %c0_5] : memref<1x128x128xf32, #tpu.memory_space<vmem>>, vector<1x128x128xf32>
    %8 = vector.shape_cast %7 : vector<1x128x128xf32> to vector<128x128xf32>
    %cst = arith.constant dense<0.000000e+00> : vector<8x128xf32>
    %9 = tpu.matmul %6, %8, %cst {dimension_numbers = #tpu.dot_dimension_numbers<[1], [0], [0], [1], [0, 0, 1, 1], [], []>} : vector<8x128xf32>, vector<128x128xf32>, vector<8x128xf32> -> vector<8x128xf32>
    %c0_6 = arith.constant 0 : index
    %c0_7 = arith.constant 0 : index
    %10 = vector.load %arg6[%c0_6, %c0_7] : memref<1x128xf32, #tpu.memory_space<vmem>>, vector<1x128xf32>
    %11 = vector.broadcast %10 : vector<1x128xf32> to vector<8x128xf32>
    %12 = arith.addf %9, %11 : vector<8x128xf32>
    %c0_8 = arith.constant 0 : index
    %c0_9 = arith.constant 0 : index
    %13 = vector.load %arg7[%c0_8, %c0_9] : memref<1x128xf32, #tpu.memory_space<vmem>>, vector<1x128xf32>
    %14 = vector.broadcast %13 : vector<1x128xf32> to vector<8x128xf32>
    %15 = arith.mulf %14, %12 : vector<8x128xf32>
    %16 = arith.negf %15 : vector<8x128xf32>
    %17 = math.exp %16 : vector<8x128xf32>
    %cst_10 = arith.constant 1.000000e+00 : f32
    %18 = vector.broadcast %cst_10 : f32 to vector<8x128xf32>
    %19 = arith.addf %18, %17 : vector<8x128xf32>
    %20 = arith.divf %18, %19 : vector<8x128xf32>
    %c0_11 = arith.constant 0 : index
    %c0_12 = arith.constant 0 : index
    %21 = vector.load %arg8[%c0_11, %c0_12] : memref<1x128xf32, #tpu.memory_space<vmem>>, vector<1x128xf32>
    %c0_13 = arith.constant 0 : index
    %c0_14 = arith.constant 0 : index
    %22 = vector.load %arg9[%c0_13, %c0_14] : memref<1x128xf32, #tpu.memory_space<vmem>>, vector<1x128xf32>
    %23 = vector.broadcast %22 : vector<1x128xf32> to vector<8x128xf32>
    %24 = arith.mulf %20, %23 : vector<8x128xf32>
    %25 = vector.broadcast %21 : vector<1x128xf32> to vector<8x128xf32>
    %26 = arith.addf %25, %24 : vector<8x128xf32>
    %27 = arith.mulf %26, %12 : vector<8x128xf32>
    %28 = arith.addf %27, %2 : vector<8x128xf32>
    %c0_15 = arith.constant 0 : index
    %c0_16 = arith.constant 0 : index
    %29 = vector.load %arg10[%c0_15, %c0_16] : memref<8x128xf32, #tpu.memory_space<vmem>>, vector<8x128xf32>
    tpu.vector_store %arg10[%c0_15, %c0_16], %28 {strides = array<i32>} : memref<8x128xf32, #tpu.memory_space<vmem>>, vector<8x128xf32>,
    return
  }
  func.func @transform_0(%arg0: i32, %arg1: i32) -> i32 {
    %c0_i32 = arith.constant 0 : i32
    %c0_i32_0 = arith.constant 0 : i32
    return %c0_i32 : i32
  }
  func.func @transform_1(%arg0: i32, %arg1: i32) -> i32 {
    %c0_i32 = arith.constant 0 : i32
    %c0_i32_0 = arith.constant 0 : i32
    return %c0_i32 : i32
  }
  func.func @transform_2(%arg0: i32, %arg1: i32) -> (i32, i32) {
    %c0_i32 = arith.constant 0 : i32
    return %arg1, %arg0 : i32, i32
  }
  func.func @transform_3(%arg0: i32, %arg1: i32) -> (i32, i32, i32) {
    %c0_i32 = arith.constant 0 : i32
    %c0_i32_0 = arith.constant 0 : i32
    %c0_i32_1 = arith.constant 0 : i32
    return %arg0, %c0_i32, %c0_i32_0 : i32, i32, i32
  }
  func.func @transform_4(%arg0: i32, %arg1: i32) -> (i32, i32) {
    %c0_i32 = arith.constant 0 : i32
    %c0_i32_0 = arith.constant 0 : i32
    return %c0_i32, %arg0 : i32, i32
  }
  func.func @transform_5(%arg0: i32, %arg1: i32) -> (i32, i32) {
    %c0_i32 = arith.constant 0 : i32
    %c0_i32_0 = arith.constant 0 : i32
    return %c0_i32, %arg0 : i32, i32
  }
  func.func @transform_6(%arg0: i32, %arg1: i32) -> (i32, i32) {
    %c0_i32 = arith.constant 0 : i32
    %c0_i32_0 = arith.constant 0 : i32
    return %c0_i32, %arg0 : i32, i32
  }
  func.func @transform_7(%arg0: i32, %arg1: i32) -> (i32, i32) {
    %c0_i32 = arith.constant 0 : i32
    %c0_i32_0 = arith.constant 0 : i32
    return %c0_i32, %arg0 : i32, i32
  }
  func.func @transform_8(%arg0: i32, %arg1: i32) -> (i32, i32) {
    %c0_i32 = arith.constant 0 : i32
    return %arg1, %arg0 : i32, i32
  }
}

</mosaic_0001>

<llo_original>
// kernel: tpu_custom_call.1
$region0: #{tpu_custom_call.1}
  #allocation0 [shape = 'u32[]', space=smem, size = 0x4, offset = 0x4, fixed_abs, tag = 'smem constant byte address 0x4 - core index']
  #allocation1 [shape = 'u32[144,128]{1,0:T(1,128)}', space=vmem, size = 0x12000, scoped, tag = 'internal scratch']
  #allocation2 [shape = 'f32[1]{0:T(128)S(6)}', space=smem, size = 0x200, scoped, tag = 'scoped memory for tpu_custom_call.1']
  #allocation3 [shape = 'f32[1]{0:T(128)S(6)}', space=smem, size = 0x200, scoped, tag = 'scoped memory for tpu_custom_call.1']
  %s0 = inlined_call_operand.<no memory space> [shape: f32[1], index: 0, kind: input, shape index: {}]
  %s1 = inlined_call_operand.<no memory space> [shape: f32[1], index: 1, kind: input, shape index: {}]
  %s2 = inlined_call_operand.hbm [shape: f32[8,256], index: 2, kind: input, shape index: {}]
  %s3 = inlined_call_operand.hbm [shape: f32[2,128,128], index: 3, kind: input, shape index: {}]
  %s4 = inlined_call_operand.vmem [shape: f32[1,256], index: 4, kind: input, shape index: {}]
  %s5 = inlined_call_operand.vmem [shape: f32[1,256], index: 5, kind: input, shape index: {}]
  %s6 = inlined_call_operand.vmem [shape: f32[1,256], index: 6, kind: input, shape index: {}]
  %s7 = inlined_call_operand.vmem [shape: f32[1,256], index: 7, kind: input, shape index: {}]
  %s8 = inlined_call_operand.hbm [shape: f32[8,256], index: 8, kind: output, shape index: {}]
  %s9 = sld [smem:[#allocation0]]
  $region50: #{tpu_custom_call.1} parent=0
    _
  %s11 = ssub.s32 1, %s9
  %s12 = scalar_select 0, %s11, %s9
  %13 = sst [smem:[#allocation2]] %s0
  %14 = sst [smem:[#allocation3]] %s1
  $region1: #{tpu_custom_call.1} parent=0
    #allocation4 [shape = 'u8[8192]{0}', space=vmem, size = 0x2000, scoped, tag = 'input window, operand 2, single buffered']
    #allocation5 [shape = 's32[1]{0}', space=sflag, size = 0x4, scoped, tag = 'scoped memory for tpu_custom_call.1']
    #allocation6 [shape = 's32[1]{0}', space=sflag, size = 0x4, scoped, tag = 'scoped memory for tpu_custom_call.1']
    #allocation7 [shape = 'u8[131072]{0}', space=vmem, size = 0x20000, scoped, tag = 'input window, operand 3, single buffered']
    #allocation8 [shape = 's32[1]{0}', space=sflag, size = 0x4, scoped, tag = 'scoped memory for tpu_custom_call.1']
    #allocation9 [shape = 'u8[8192]{0}', space=vmem, size = 0x2000, scoped, tag = 'output window, operand 0, single buffered']
    %15 = vsyncpa [#allocation5], 0
    %16 = vsyncpa [#allocation8], 0
    %17 = vsyncpa [#allocation6], 0
    // Predicated region
    $region2: #{tpu_custom_call.1} parent=1 // pred_check
      _
    $region3: #{tpu_custom_call.1} parent=1 // pred_check_branch
      %19 = sbr.rel (0) target = $region5
    $region4: #{tpu_custom_call.1} parent=1 // pred_region
      _
    $region5: #{tpu_custom_call.1} parent=1 // pred_fallthru
      _
    // Predicated region
    $region6: #{tpu_custom_call.1} parent=1 // pred_check
      _
    $region7: #{tpu_custom_call.1} parent=1 // pred_check_branch
      %21 = sbr.rel (0) target = $region9
    $region8: #{tpu_custom_call.1} parent=1 // pred_region
      _
    $region9: #{tpu_custom_call.1} parent=1 // pred_fallthru
      _
    // Predicated region
    $region10: #{tpu_custom_call.1} parent=1 // pred_check
      _
    $region11: #{tpu_custom_call.1} parent=1 // pred_check_branch
      %23 = sbr.rel (0) target = $region13
    $region12: #{tpu_custom_call.1} parent=1 // pred_region
      %s25 = ssub.s32 256, 256
      %26 = vsyncadd [#allocation5], %s25
      %s28 = sshll.u32 [#allocation4], 4
      %s29 = int_to_ptr.vmem [resolvable:$true] %s28
      %31 = dma.hbm_to_vmem [thread:$0]  %s2, 256, %s29, [#allocation5]
    $region13: #{tpu_custom_call.1} parent=1 // pred_fallthru
      _
    // Predicated region
    $region14: #{tpu_custom_call.1} parent=1 // pred_check
      _
    $region15: #{tpu_custom_call.1} parent=1 // pred_check_branch
      %33 = sbr.rel (0) target = $region17
    $region16: #{tpu_custom_call.1} parent=1 // pred_region
      %s35 = ssub.s32 4096, 4096
      %36 = vsyncadd [#allocation8], %s35
      %s37 = sshll.u32 [#allocation7], 4
      %s38 = int_to_ptr.vmem [resolvable:$true] %s37
      %43 = dma.hbm_to_vmem [thread:$0]  %s3, 4096, %s38, [#allocation8], 128, 128, 8
    $region17: #{tpu_custom_call.1} parent=1 // pred_fallthru
      _
    // Predicated region
    $region18: #{tpu_custom_call.1} parent=1 // pred_check
      _
    $region19: #{tpu_custom_call.1} parent=1 // pred_check_branch
      %45 = sbr.rel (0) target = $region21
    $region20: #{tpu_custom_call.1} parent=1 // pred_region
      _
    $region21: #{tpu_custom_call.1} parent=1 // pred_fallthru
      _
    // Predicated region
    $region22: #{tpu_custom_call.1} parent=1 // pred_check
      _
    $region23: #{tpu_custom_call.1} parent=1 // pred_check_branch
      %47 = sbr.rel (0) target = $region25
    $region24: #{tpu_custom_call.1} parent=1 // pred_region
      _
    $region25: #{tpu_custom_call.1} parent=1 // pred_fallthru
      _
    // Predicated region
    $region26: #{tpu_custom_call.1} parent=1 // pred_check
      _
    $region27: #{tpu_custom_call.1} parent=1 // pred_check_branch
      %49 = sbr.rel (0) target = $region29
    $region28: #{tpu_custom_call.1} parent=1 // pred_region
      _
    $region29: #{tpu_custom_call.1} parent=1 // pred_fallthru
      _
    // Predicated region
    $region30: #{tpu_custom_call.1} parent=1 // pred_check
      _
    $region31: #{tpu_custom_call.1} parent=1 // pred_check_branch
      %51 = sbr.rel (0) target = $region33
    $region32: #{tpu_custom_call.1} parent=1 // pred_region
      _
    $region33: #{tpu_custom_call.1} parent=1 // pred_fallthru
      _
    // Predicated region
    $region34: #{tpu_custom_call.1} parent=1 // pred_check
      _
    $region35: #{tpu_custom_call.1} parent=1 // pred_check_branch
      %53 = sbr.rel (0) target = $region37
    $region36: #{tpu_custom_call.1} parent=1 // pred_region
      %54 = dma.done [#allocation5], 256
    $region37: #{tpu_custom_call.1} parent=1 // pred_fallthru
      _
    // Predicated region
    $region38: #{tpu_custom_call.1} parent=1 // pred_check
      _
    $region39: #{tpu_custom_call.1} parent=1 // pred_check_branch
      %56 = sbr.rel (0) target = $region41
    $region40: #{tpu_custom_call.1} parent=1 // pred_region
      %57 = dma.done [#allocation8], 4096
    $region41: #{tpu_custom_call.1} parent=1 // pred_fallthru
      _
    %s58 = sld [smem:[#allocation2]]
    %s59 = sld [smem:[#allocation3]]
    %v60 = vld [vmem:[#allocation4] sm:$0xff]
    %v61 = vstv %s58
    %v62 = vmul.f32 %v60, %v61
    %v63 = vstv %s59
    %v64 = vadd.f32 %v62, %v63
    %v65 = vld [vmem:[#allocation7] sm:$0xff]
    %v66 = vld [vmem:[#allocation7 + $0x8] sm:$0xff]
    %v67 = vld [vmem:[#allocation7 + $0x10] sm:$0xff]
    %v68 = vld [vmem:[#allocation7 + $0x18] sm:$0xff]
    %v69 = vld [vmem:[#allocation7 + $0x20] sm:$0xff]
    %v70 = vld [vmem:[#allocation7 + $0x28] sm:$0xff]
    %v71 = vld [vmem:[#allocation7 + $0x30] sm:$0xff]
    %v72 = vld [vmem:[#allocation7 + $0x38] sm:$0xff]
    %v73 = vld [vmem:[#allocation7 + $0x40] sm:$0xff]
    %v74 = vld [vmem:[#allocation7 + $0x48] sm:$0xff]
    %v75 = vld [vmem:[#allocation7 + $0x50] sm:$0xff]
    %v76 = vld [vmem:[#allocation7 + $0x58] sm:$0xff]
    %v77 = vld [vmem:[#allocation7 + $0x60] sm:$0xff]
    %v78 = vld [vmem:[#allocation7 + $0x68] sm:$0xff]
    %v79 = vld [vmem:[#allocation7 + $0x70] sm:$0xff]
    %v80 = vld [vmem:[#allocation7 + $0x78] sm:$0xff]
    %v81 = vld [vmem:[%s4] sm:$0x1]
    %v83 = vlaneseq
    %v84 = vshrl.u32 %v83, 7
    %v85 = vsub.s32 0, %v84
    %v86 = vrot.slane %v81, %v85
    %88 = vmatprep.subr.mxu0 0.0
    %89 = vmatpush1.msra.mxu0 %v65
    %90 = vmatprep.subr.mxu0 0.0
    %91 = vmatpush1.msra.mxu0 %v66
    %92 = vmatprep.subr.mxu0 0.0
    %93 = vmatpush1.msra.mxu0 %v67
    %94 = vmatprep.subr.mxu0 0.0
    %95 = vmatpush1.msra.mxu0 %v68
    %96 = vmatprep.subr.mxu0 0.0
    %97 = vmatpush1.msra.mxu0 %v69
    %98 = vmatprep.subr.mxu0 0.0
    %99 = vmatpush1.msra.mxu0 %v70
    %100 = vmatprep.subr.mxu0 0.0
    %101 = vmatpush1.msra.mxu0 %v71
    %102 = vmatprep.subr.mxu0 0.0
    %103 = vmatpush1.msra.mxu0 %v72
    %104 = vmatprep.subr.mxu0 0.0
    %105 = vmatpush1.msra.mxu0 %v73
    %106 = vmatprep.subr.mxu0 0.0
    %107 = vmatpush1.msra.mxu0 %v74
    %108 = vmatprep.subr.mxu0 0.0
    %109 = vmatpush1.msra.mxu0 %v75
    %110 = vmatprep.subr.mxu0 0.0
    %111 = vmatpush1.msra.mxu0 %v76
    %112 = vmatprep.subr.mxu0 0.0
    %113 = vmatpush1.msra.mxu0 %v77
    %114 = vmatprep.subr.mxu0 0.0
    %115 = vmatpush1.msra.mxu0 %v78
    %116 = vmatprep.subr.mxu0 0.0
    %117 = vmatpush1.msra.mxu0 %v79
    %118 = vmatprep.subr.mxu0 0.0
    %119 = vmatpush1.msra.mxu0 %v80
    %120 = vmatprep.subr.mxu0 0.0
    %121 = vmatpush1.msra.mxu0 0.0
    %122 = vmatprep.subr.mxu0 0.0
    %123 = vmatpush1.msra.mxu0 0.0
    %124 = vmatprep.subr.mxu0 0.0
    %125 = vmatpush1.msra.mxu0 0.0
    %126 = vmatprep.subr.mxu0 0.0
    %127 = vmatpush1.msra.mxu0 0.0
    %128 = vmatprep.subr.mxu0 0.0
    %129 = vmatpush1.msra.mxu0 0.0
    %130 = vmatprep.subr.mxu0 0.0
    %131 = vmatpush1.msra.mxu0 0.0
    %132 = vmatprep.subr.mxu0 0.0
    %133 = vmatpush1.msra.mxu0 0.0
    %134 = vmatprep.subr.mxu0 0.0
    %135 = vmatpush1.msra.mxu0 0.0
    %136 = vmatprep.subr.mxu0 0.0
    %137 = vmatpush1.msra.mxu0 0.0
    %138 = vmatprep.subr.mxu0 0.0
    %139 = vmatpush1.msra.mxu0 0.0
    %140 = vmatprep.subr.mxu0 0.0
    %141 = vmatpush1.msra.mxu0 0.0
    %142 = vmatprep.subr.mxu0 0.0
    %143 = vmatpush1.msra.mxu0 0.0
    %144 = vmatprep.subr.mxu0 0.0
    %145 = vmatpush1.msra.mxu0 0.0
    %146 = vmatprep.subr.mxu0 0.0
    %147 = vmatpush1.msra.mxu0 0.0
    %148 = vmatprep.subr.mxu0 0.0
    %149 = vmatpush1.msra.mxu0 0.0
    %150 = vmatprep.subr.mxu0 0.0
    %151 = vmatpush1.msra.mxu0 0.0
    %152 = vmatprep.mubr.f32.mxu0 0.0
    %153 = vmatmul.mubr.f32.gmra.mrb[0].mxu0 %v64
    %v154 = vpop.f32.mrb[0].mxu0
    %v155 = vadd.f32 %v86, %v154
    %v156 = vpop.f32.mrb[0].mxu0
    %157 = vdwg.mxu0
    %v158 = vld [vmem:[%s5] sm:$0x1]
    %v160 = vlaneseq
    %v161 = vshrl.u32 %v160, 7
    %v162 = vsub.s32 0, %v161
    %v163 = vrot.slane %v158, %v162
    %v165 = vmul.f32 %v163, %v155
    %v166 = vxor.u32 %v165, 2147483648
    %v167 = vmul.f32 %v166, 1.442695
    %v168 = vpow.pop %v167
    %v169 = vadd.f32 %v168, 1.0
    %v170 = vrcp.pop %v169
    %v171 = vmul.f32 1.0, %v170
    %v172 = vld [vmem:[%s6] sm:$0x1]
    %v173 = vld [vmem:[%s7] sm:$0x1]
    %v175 = vlaneseq
    %v176 = vshrl.u32 %v175, 7
    %v177 = vsub.s32 0, %v176
    %v178 = vrot.slane %v173, %v177
    %v180 = vmul.f32 %v171, %v178
    %v182 = vlaneseq
    %v183 = vshrl.u32 %v182, 7
    %v184 = vsub.s32 0, %v183
    %v185 = vrot.slane %v172, %v184
    %v187 = vadd.f32 %v185, %v180
    %v188 = vmul.f32 %v187, %v155
    %v189 = vadd.f32 %v188, %v60
    %190 = vst [vmem:[#allocation9] sm:$0xff] %v189
    %s191 = scalar_lea.vmem [#allocation4], 8
    %v192 = vld [vmem:[%s191] sm:$0xff]
    %v193 = vmul.f32 %v192, %v61
    %v194 = vadd.f32 %v193, %v63
    %s195 = scalar_lea.vmem [#allocation7], 128
    %v196 = vld [vmem:[%s195] sm:$0xff]
    %v197 = vld [vmem:[%s195 + $0x8] sm:$0xff]
    %v198 = vld [vmem:[%s195 + $0x10] sm:$0xff]
    %v199 = vld [vmem:[%s195 + $0x18] sm:$0xff]
    %v200 = vld [vmem:[%s195 + $0x20] sm:$0xff]
    %v201 = vld [vmem:[%s195 + $0x28] sm:$0xff]
    %v202 = vld [vmem:[%s195 + $0x30] sm:$0xff]
    %v203 = vld [vmem:[%s195 + $0x38] sm:$0xff]
    %v204 = vld [vmem:[%s195 + $0x40] sm:$0xff]
    %v205 = vld [vmem:[%s195 + $0x48] sm:$0xff]
    %v206 = vld [vmem:[%s195 + $0x50] sm:$0xff]
    %v207 = vld [vmem:[%s195 + $0x58] sm:$0xff]
    %v208 = vld [vmem:[%s195 + $0x60] sm:$0xff]
    %v209 = vld [vmem:[%s195 + $0x68] sm:$0xff]
    %v210 = vld [vmem:[%s195 + $0x70] sm:$0xff]
    %v211 = vld [vmem:[%s195 + $0x78] sm:$0xff]
    %s212 = scalar_lea.vmem %s4, 1
    %v213 = vld [vmem:[%s212] sm:$0x1]
    %v215 = vlaneseq
    %v216 = vshrl.u32 %v215, 7
    %v217 = vsub.s32 0, %v216
    %v218 = vrot.slane %v213, %v217
    %220 = vmatprep.subr.mxu0 0.0
    %221 = vmatpush1.msra.mxu0 %v196
    %222 = vmatprep.subr.mxu0 0.0
    %223 = vmatpush1.msra.mxu0 %v197
    %224 = vmatprep.subr.mxu0 0.0
    %225 = vmatpush1.msra.mxu0 %v198
    %226 = vmatprep.subr.mxu0 0.0
    %227 = vmatpush1.msra.mxu0 %v199
    %228 = vmatprep.subr.mxu0 0.0
    %229 = vmatpush1.msra.mxu0 %v200
    %230 = vmatprep.subr.mxu0 0.0
    %231 = vmatpush1.msra.mxu0 %v201
    %232 = vmatprep.subr.mxu0 0.0
    %233 = vmatpush1.msra.mxu0 %v202
    %234 = vmatprep.subr.mxu0 0.0
    %235 = vmatpush1.msra.mxu0 %v203
    %236 = vmatprep.subr.mxu0 0.0
    %237 = vmatpush1.msra.mxu0 %v204
    %238 = vmatprep.subr.mxu0 0.0
    %239 = vmatpush1.msra.mxu0 %v205
    %240 = vmatprep.subr.mxu0 0.0
    %241 = vmatpush1.msra.mxu0 %v206
    %242 = vmatprep.subr.mxu0 0.0
    %243 = vmatpush1.msra.mxu0 %v207
    %244 = vmatprep.subr.mxu0 0.0
    %245 = vmatpush1.msra.mxu0 %v208
    %246 = vmatprep.subr.mxu0 0.0
    %247 = vmatpush1.msra.mxu0 %v209
    %248 = vmatprep.subr.mxu0 0.0
    %249 = vmatpush1.msra.mxu0 %v210
    %250 = vmatprep.subr.mxu0 0.0
    %251 = vmatpush1.msra.mxu0 %v211
    %252 = vmatprep.subr.mxu0 0.0
    %253 = vmatpush1.msra.mxu0 0.0
    %254 = vmatprep.subr.mxu0 0.0
    %255 = vmatpush1.msra.mxu0 0.0
    %256 = vmatprep.subr.mxu0 0.0
    %257 = vmatpush1.msra.mxu0 0.0
    %258 = vmatprep.subr.mxu0 0.0
    %259 = vmatpush1.msra.mxu0 0.0
    %260 = vmatprep.subr.mxu0 0.0
    %261 = vmatpush1.msra.mxu0 0.0
    %262 = vmatprep.subr.mxu0 0.0
    %263 = vmatpush1.msra.mxu0 0.0
    %264 = vmatprep.subr.mxu0 0.0
    %265 = vmatpush1.msra.mxu0 0.0
    %266 = vmatprep.subr.mxu0 0.0
    %267 = vmatpush1.msra.mxu0 0.0
    %268 = vmatprep.subr.mxu0 0.0
    %269 = vmatpush1.msra.mxu0 0.0
    %270 = vmatprep.subr.mxu0 0.0
    %271 = vmatpush1.msra.mxu0 0.0
    %272 = vmatprep.subr.mxu0 0.0
    %273 = vmatpush1.msra.mxu0 0.0
    %274 = vmatprep.subr.mxu0 0.0
    %275 = vmatpush1.msra.mxu0 0.0
    %276 = vmatprep.subr.mxu0 0.0
    %277 = vmatpush1.msra.mxu0 0.0
    %278 = vmatprep.subr.mxu0 0.0
    %279 = vmatpush1.msra.mxu0 0.0
    %280 = vmatprep.subr.mxu0 0.0
    %281 = vmatpush1.msra.mxu0 0.0
    %282 = vmatprep.subr.mxu0 0.0
    %283 = vmatpush1.msra.mxu0 0.0
    %284 = vmatprep.mubr.f32.mxu0 0.0
    %285 = vmatmul.mubr.f32.gmra.mrb[0].mxu0 %v194
    %v286 = vpop.f32.mrb[0].mxu0
    %v287 = vadd.f32 %v218, %v286
    %v288 = vpop.f32.mrb[0].mxu0
    %289 = vdwg.mxu0
    %s290 = scalar_lea.vmem %s5, 1
    %v291 = vld [vmem:[%s290] sm:$0x1]
    %v293 = vlaneseq
    %v294 = vshrl.u32 %v293, 7
    %v295 = vsub.s32 0, %v294
    %v296 = vrot.slane %v291, %v295
    %v298 = vmul.f32 %v296, %v287
    %v299 = vxor.u32 %v298, 2147483648
    %v300 = vmul.f32 %v299, 1.442695
    %v301 = vpow.pop %v300
    %v302 = vadd.f32 %v301, 1.0
    %v303 = vrcp.pop %v302
    %v304 = vmul.f32 1.0, %v303
    %s305 = scalar_lea.vmem %s6, 1
    %v306 = vld [vmem:[%s305] sm:$0x1]
    %s307 = scalar_lea.vmem %s7, 1
    %v308 = vld [vmem:[%s307] sm:$0x1]
    %v310 = vlaneseq
    %v311 = vshrl.u32 %v310, 7
    %v312 = vsub.s32 0, %v311
    %v313 = vrot.slane %v308, %v312
    %v315 = vmul.f32 %v304, %v313
    %v317 = vlaneseq
    %v318 = vshrl.u32 %v317, 7
    %v319 = vsub.s32 0, %v318
    %v320 = vrot.slane %v306, %v319
    %v322 = vadd.f32 %v320, %v315
    %v323 = vmul.f32 %v322, %v287
    %v324 = vadd.f32 %v323, %v192
    %s325 = scalar_lea.vmem [#allocation9], 8
    %326 = vst [vmem:[%s325] sm:$0xff] %v324
    // Predicated region
    $region42: #{tpu_custom_call.1} parent=1 // pred_check
      _
    $region43: #{tpu_custom_call.1} parent=1 // pred_check_branch
      %328 = sbr.rel (0) target = $region45
    $region44: #{tpu_custom_call.1} parent=1 // pred_region
      %s330 = ssub.s32 256, 256
      %331 = vsyncadd [#allocation6], %s330
      %s333 = sshll.u32 [#allocation9], 4
      %s334 = int_to_ptr.vmem [resolvable:$true] %s333
      %336 = dma.vmem_to_hbm [thread:$0]  %s334, 256, %s8, [#allocation6]
    $region45: #{tpu_custom_call.1} parent=1 // pred_fallthru
      _
    // Predicated region
    $region46: #{tpu_custom_call.1} parent=1 // pred_check
      _
    $region47: #{tpu_custom_call.1} parent=1 // pred_check_branch
      %338 = sbr.rel (0) target = $region49
    $region48: #{tpu_custom_call.1} parent=1 // pred_region
      %339 = dma.done [#allocation6], 256
    $region49: #{tpu_custom_call.1} parent=1 // pred_fallthru
      _
    %340 = vsyncpa [#allocation5], 1
    %341 = vsyncpa [#allocation8], 1
    %342 = vsyncpa [#allocation6], 1

// kernel: tpu_custom_call.1
$region0: #{tpu_custom_call.1}
  #allocation0 [shape = 'u32[]', space=smem, size = 0x4, offset = 0x4, fixed_abs, tag = 'smem constant byte address 0x4 - core index']
  #allocation1 [shape = 'u32[144,128]{1,0:T(1,128)}', space=vmem, size = 0x12000, scoped, tag = 'internal scratch']
  #allocation2 [shape = 'f32[1]{0:T(128)S(6)}', space=smem, size = 0x200, scoped, tag = 'scoped memory for tpu_custom_call.1']
  #allocation3 [shape = 'f32[1]{0:T(128)S(6)}', space=smem, size = 0x200, scoped, tag = 'scoped memory for tpu_custom_call.1']
  %s0 = inlined_call_operand.<no memory space> [shape: f32[1], index: 0, kind: input, shape index: {}]
  %s1 = inlined_call_operand.<no memory space> [shape: f32[1], index: 1, kind: input, shape index: {}]
  %s2 = inlined_call_operand.hbm [shape: f32[8,256], index: 2, kind: input, shape index: {}]
  %s3 = inlined_call_operand.hbm [shape: f32[2,128,128], index: 3, kind: input, shape index: {}]
  %s4 = inlined_call_operand.vmem [shape: f32[1,256], index: 4, kind: input, shape index: {}]
  %s5 = inlined_call_operand.vmem [shape: f32[1,256], index: 5, kind: input, shape index: {}]
  %s6 = inlined_call_operand.vmem [shape: f32[1,256], index: 6, kind: input, shape index: {}]
  %s7 = inlined_call_operand.vmem [shape: f32[1,256], index: 7, kind: input, shape index: {}]
  %s8 = inlined_call_operand.hbm [shape: f32[8,256], index: 8, kind: output, shape index: {}]
  %s9 = sld [smem:[#allocation0]]
  $region50: #{tpu_custom_call.1} parent=0
    _
  %s11 = ssub.s32 1, %s9
  %s12 = scalar_select 0, %s11, %s9
  %13 = sst [smem:[#allocation2]] %s0
  %14 = sst [smem:[#allocation3]] %s1
  $region1: #{tpu_custom_call.1} parent=0
    #allocation4 [shape = 'u8[8192]{0}', space=vmem, size = 0x2000, scoped, tag = 'input window, operand 2, single buffered']
    #allocation5 [shape = 's32[1]{0}', space=sflag, size = 0x4, scoped, tag = 'scoped memory for tpu_custom_call.1']
    #allocation6 [shape = 's32[1]{0}', space=sflag, size = 0x4, scoped, tag = 'scoped memory for tpu_custom_call.1']
    #allocation7 [shape = 'u8[131072]{0}', space=vmem, size = 0x20000, scoped, tag = 'input window, operand 3, single buffered']
    #allocation8 [shape = 's32[1]{0}', space=sflag, size = 0x4, scoped, tag = 'scoped memory for tpu_custom_call.1']
    #allocation9 [shape = 'u8[8192]{0}', space=vmem, size = 0x2000, scoped, tag = 'output window, operand 0, single buffered']
    %15 = vsyncpa [#allocation5], 0
    %16 = vsyncpa [#allocation8], 0
    %17 = vsyncpa [#allocation6], 0
    // Predicated region
    $region2: #{tpu_custom_call.1} parent=1 // pred_check
      _
    $region3: #{tpu_custom_call.1} parent=1 // pred_check_branch
      %19 = sbr.rel (0) target = $region5
    $region4: #{tpu_custom_call.1} parent=1 // pred_region
      _
    $region5: #{tpu_custom_call.1} parent=1 // pred_fallthru
      _
    // Predicated region
    $region6: #{tpu_custom_call.1} parent=1 // pred_check
      _
    $region7: #{tpu_custom_call.1} parent=1 // pred_check_branch
      %21 = sbr.rel (0) target = $region9
    $region8: #{tpu_custom_call.1} parent=1 // pred_region
      _
    $region9: #{tpu_custom_call.1} parent=1 // pred_fallthru
      _
    // Predicated region
    $region10: #{tpu_custom_call.1} parent=1 // pred_check
      _
    $region11: #{tpu_custom_call.1} parent=1 // pred_check_branch
      %23 = sbr.rel (0) target = $region13
    $region12: #{tpu_custom_call.1} parent=1 // pred_region
      %s25 = ssub.s32 256, 256
      %26 = vsyncadd [#allocation5], %s25
      %s28 = sshll.u32 [#allocation4], 4
      %s29 = int_to_ptr.vmem [resolvable:$true] %s28
      %31 = dma.hbm_to_vmem [thread:$0]  %s2, 256, %s29, [#allocation5]
    $region13: #{tpu_custom_call.1} parent=1 // pred_fallthru
      _
    // Predicated region
    $region14: #{tpu_custom_call.1} parent=1 // pred_check
      _
    $region15: #{tpu_custom_call.1} parent=1 // pred_check_branch
      %33 = sbr.rel (0) target = $region17
    $region16: #{tpu_custom_call.1} parent=1 // pred_region
      %s35 = ssub.s32 4096, 4096
      %36 = vsyncadd [#allocation8], %s35
      %s37 = sshll.u32 [#allocation7], 4
      %s38 = int_to_ptr.vmem [resolvable:$true] %s37
      %43 = dma.hbm_to_vmem [thread:$0]  %s3, 4096, %s38, [#allocation8], 128, 128, 8
    $region17: #{tpu_custom_call.1} parent=1 // pred_fallthru
      _
    // Predicated region
    $region18: #{tpu_custom_call.1} parent=1 // pred_check
      _
    $region19: #{tpu_custom_call.1} parent=1 // pred_check_branch
      %45 = sbr.rel (0) target = $region21
    $region20: #{tpu_custom_call.1} parent=1 // pred_region
      _
    $region21: #{tpu_custom_call.1} parent=1 // pred_fallthru
      _
    // Predicated region
    $region22: #{tpu_custom_call.1} parent=1 // pred_check
      _
    $region23: #{tpu_custom_call.1} parent=1 // pred_check_branch
      %47 = sbr.rel (0) target = $region25
    $region24: #{tpu_custom_call.1} parent=1 // pred_region
      _
    $region25: #{tpu_custom_call.1} parent=1 // pred_fallthru
      _
    // Predicated region
    $region26: #{tpu_custom_call.1} parent=1 // pred_check
      _
    $region27: #{tpu_custom_call.1} parent=1 // pred_check_branch
      %49 = sbr.rel (0) target = $region29
    $region28: #{tpu_custom_call.1} parent=1 // pred_region
      _
    $region29: #{tpu_custom_call.1} parent=1 // pred_fallthru
      _
    // Predicated region
    $region30: #{tpu_custom_call.1} parent=1 // pred_check
      _
    $region31: #{tpu_custom_call.1} parent=1 // pred_check_branch
      %51 = sbr.rel (0) target = $region33
    $region32: #{tpu_custom_call.1} parent=1 // pred_region
      _
    $region33: #{tpu_custom_call.1} parent=1 // pred_fallthru
      _
    // Predicated region
    $region34: #{tpu_custom_call.1} parent=1 // pred_check
      _
    $region35: #{tpu_custom_call.1} parent=1 // pred_check_branch
      %53 = sbr.rel (0) target = $region37
    $region36: #{tpu_custom_call.1} parent=1 // pred_region
      %54 = dma.done [#allocation5], 256
    $region37: #{tpu_custom_call.1} parent=1 // pred_fallthru
      _
    // Predicated region
    $region38: #{tpu_custom_call.1} parent=1 // pred_check
      _
    $region39: #{tpu_custom_call.1} parent=1 // pred_check_branch
      %56 = sbr.rel (0) target = $region41
    $region40: #{tpu_custom_call.1} parent=1 // pred_region
      %57 = dma.done [#allocation8], 4096
    $region41: #{tpu_custom_call.1} parent=1 // pred_fallthru
      _
    %s58 = sld [smem:[#allocation2]]
    %s59 = sld [smem:[#allocation3]]
    %v60 = vld [vmem:[#allocation4] sm:$0xff]
    %v61 = vstv %s58
    %v62 = vmul.f32 %v60, %v61
    %v63 = vstv %s59
    %v64 = vadd.f32 %v62, %v63
    %v65 = vld [vmem:[#allocation7] sm:$0xff]
    %v66 = vld [vmem:[#allocation7 + $0x8] sm:$0xff]
    %v67 = vld [vmem:[#allocation7 + $0x10] sm:$0xff]
    %v68 = vld [vmem:[#allocation7 + $0x18] sm:$0xff]
    %v69 = vld [vmem:[#allocation7 + $0x20] sm:$0xff]
    %v70 = vld [vmem:[#allocation7 + $0x28] sm:$0xff]
    %v71 = vld [vmem:[#allocation7 + $0x30] sm:$0xff]
    %v72 = vld [vmem:[#allocation7 + $0x38] sm:$0xff]
    %v73 = vld [vmem:[#allocation7 + $0x40] sm:$0xff]
    %v74 = vld [vmem:[#allocation7 + $0x48] sm:$0xff]
    %v75 = vld [vmem:[#allocation7 + $0x50] sm:$0xff]
    %v76 = vld [vmem:[#allocation7 + $0x58] sm:$0xff]
    %v77 = vld [vmem:[#allocation7 + $0x60] sm:$0xff]
    %v78 = vld [vmem:[#allocation7 + $0x68] sm:$0xff]
    %v79 = vld [vmem:[#allocation7 + $0x70] sm:$0xff]
    %v80 = vld [vmem:[#allocation7 + $0x78] sm:$0xff]
    %v81 = vld [vmem:[%s4] sm:$0x1]
    %v83 = vlaneseq
    %v84 = vshrl.u32 %v83, 7
    %v85 = vsub.s32 0, %v84
    %v86 = vrot.slane %v81, %v85
    %88 = vmatprep.subr.mxu0 0.0
    %89 = vmatpush1.msra.mxu0 %v65
    %90 = vmatprep.subr.mxu0 0.0
    %91 = vmatpush1.msra.mxu0 %v66
    %92 = vmatprep.subr.mxu0 0.0
    %93 = vmatpush1.msra.mxu0 %v67
    %94 = vmatprep.subr.mxu0 0.0
    %95 = vmatpush1.msra.mxu0 %v68
    %96 = vmatprep.subr.mxu0 0.0
    %97 = vmatpush1.msra.mxu0 %v69
    %98 = vmatprep.subr.mxu0 0.0
    %99 = vmatpush1.msra.mxu0 %v70
    %100 = vmatprep.subr.mxu0 0.0
    %101 = vmatpush1.msra.mxu0 %v71
    %102 = vmatprep.subr.mxu0 0.0
    %103 = vmatpush1.msra.mxu0 %v72
    %104 = vmatprep.subr.mxu0 0.0
    %105 = vmatpush1.msra.mxu0 %v73
    %106 = vmatprep.subr.mxu0 0.0
    %107 = vmatpush1.msra.mxu0 %v74
    %108 = vmatprep.subr.mxu0 0.0
    %109 = vmatpush1.msra.mxu0 %v75
    %110 = vmatprep.subr.mxu0 0.0
    %111 = vmatpush1.msra.mxu0 %v76
    %112 = vmatprep.subr.mxu0 0.0
    %113 = vmatpush1.msra.mxu0 %v77
    %114 = vmatprep.subr.mxu0 0.0
    %115 = vmatpush1.msra.mxu0 %v78
    %116 = vmatprep.subr.mxu0 0.0
    %117 = vmatpush1.msra.mxu0 %v79
    %118 = vmatprep.subr.mxu0 0.0
    %119 = vmatpush1.msra.mxu0 %v80
    %120 = vmatprep.subr.mxu0 0.0
    %121 = vmatpush1.msra.mxu0 0.0
    %122 = vmatprep.subr.mxu0 0.0
    %123 = vmatpush1.msra.mxu0 0.0
    %124 = vmatprep.subr.mxu0 0.0
    %125 = vmatpush1.msra.mxu0 0.0
    %126 = vmatprep.subr.mxu0 0.0
    %127 = vmatpush1.msra.mxu0 0.0
    %128 = vmatprep.subr.mxu0 0.0
    %129 = vmatpush1.msra.mxu0 0.0
    %130 = vmatprep.subr.mxu0 0.0
    %131 = vmatpush1.msra.mxu0 0.0
    %132 = vmatprep.subr.mxu0 0.0
    %133 = vmatpush1.msra.mxu0 0.0
    %134 = vmatprep.subr.mxu0 0.0
    %135 = vmatpush1.msra.mxu0 0.0
    %136 = vmatprep.subr.mxu0 0.0
    %137 = vmatpush1.msra.mxu0 0.0
    %138 = vmatprep.subr.mxu0 0.0
    %139 = vmatpush1.msra.mxu0 0.0
    %140 = vmatprep.subr.mxu0 0.0
    %141 = vmatpush1.msra.mxu0 0.0
    %142 = vmatprep.subr.mxu0 0.0
    %143 = vmatpush1.msra.mxu0 0.0
    %144 = vmatprep.subr.mxu0 0.0
    %145 = vmatpush1.msra.mxu0 0.0
    %146 = vmatprep.subr.mxu0 0.0
    %147 = vmatpush1.msra.mxu0 0.0
    %148 = vmatprep.subr.mxu0 0.0
    %149 = vmatpush1.msra.mxu0 0.0
    %150 = vmatprep.subr.mxu0 0.0
    %151 = vmatpush1.msra.mxu0 0.0
    %152 = vmatprep.mubr.f32.mxu0 0.0
    %153 = vmatmul.mubr.f32.gmra.mrb[0].mxu0 %v64
    %v154 = vpop.f32.mrb[0].mxu0
    %v155 = vadd.f32 %v86, %v154
    %v156 = vpop.f32.mrb[0].mxu0
    %157 = vdwg.mxu0
    %v158 = vld [vmem:[%s5] sm:$0x1]
    %v160 = vlaneseq
    %v161 = vshrl.u32 %v160, 7
    %v162 = vsub.s32 0, %v161
    %v163 = vrot.slane %v158, %v162
    %v165 = vmul.f32 %v163, %v155
    %v166 = vxor.u32 %v165, 2147483648
    %v167 = vmul.f32 %v166, 1.442695
    %v168 = vpow.pop %v167
    %v169 = vadd.f32 %v168, 1.0
    %v170 = vrcp.pop %v169
    %v171 = vmul.f32 1.0, %v170
    %v172 = vld [vmem:[%s6] sm:$0x1]
    %v173 = vld [vmem:[%s7] sm:$0x1]
    %v175 = vlaneseq
    %v176 = vshrl.u32 %v175, 7
    %v177 = vsub.s32 0, %v176
    %v178 = vrot.slane %v173, %v177
    %v180 = vmul.f32 %v171, %v178
    %v182 = vlaneseq
    %v183 = vshrl.u32 %v182, 7
    %v184 = vsub.s32 0, %v183
    %v185 = vrot.slane %v172, %v184
    %v187 = vadd.f32 %v185, %v180
    %v188 = vmul.f32 %v187, %v155
    %v189 = vadd.f32 %v188, %v60
    %190 = vst [vmem:[#allocation9] sm:$0xff] %v189
    %s191 = scalar_lea.vmem [#allocation4], 8
    %v192 = vld [vmem:[%s191] sm:$0xff]
    %v193 = vmul.f32 %v192, %v61
    %v194 = vadd.f32 %v193, %v63
    %s195 = scalar_lea.vmem [#allocation7], 128
    %v196 = vld [vmem:[%s195] sm:$0xff]
    %v197 = vld [vmem:[%s195 + $0x8] sm:$0xff]
    %v198 = vld [vmem:[%s195 + $0x10] sm:$0xff]
    %v199 = vld [vmem:[%s195 + $0x18] sm:$0xff]
    %v200 = vld [vmem:[%s195 + $0x20] sm:$0xff]
    %v201 = vld [vmem:[%s195 + $0x28] sm:$0xff]
    %v202 = vld [vmem:[%s195 + $0x30] sm:$0xff]
    %v203 = vld [vmem:[%s195 + $0x38] sm:$0xff]
    %v204 = vld [vmem:[%s195 + $0x40] sm:$0xff]
    %v205 = vld [vmem:[%s195 + $0x48] sm:$0xff]
    %v206 = vld [vmem:[%s195 + $0x50] sm:$0xff]
    %v207 = vld [vmem:[%s195 + $0x58] sm:$0xff]
    %v208 = vld [vmem:[%s195 + $0x60] sm:$0xff]
    %v209 = vld [vmem:[%s195 + $0x68] sm:$0xff]
    %v210 = vld [vmem:[%s195 + $0x70] sm:$0xff]
    %v211 = vld [vmem:[%s195 + $0x78] sm:$0xff]
    %s212 = scalar_lea.vmem %s4, 1
    %v213 = vld [vmem:[%s212] sm:$0x1]
    %v215 = vlaneseq
    %v216 = vshrl.u32 %v215, 7
    %v217 = vsub.s32 0, %v216
    %v218 = vrot.slane %v213, %v217
    %220 = vmatprep.subr.mxu0 0.0
    %221 = vmatpush1.msra.mxu0 %v196
    %222 = vmatprep.subr.mxu0 0.0
    %223 = vmatpush1.msra.mxu0 %v197
    %224 = vmatprep.subr.mxu0 0.0
    %225 = vmatpush1.msra.mxu0 %v198
    %226 = vmatprep.subr.mxu0 0.0
    %227 = vmatpush1.msra.mxu0 %v199
    %228 = vmatprep.subr.mxu0 0.0
    %229 = vmatpush1.msra.mxu0 %v200
    %230 = vmatprep.subr.mxu0 0.0
    %231 = vmatpush1.msra.mxu0 %v201
    %232 = vmatprep.subr.mxu0 0.0
    %233 = vmatpush1.msra.mxu0 %v202
    %234 = vmatprep.subr.mxu0 0.0
    %235 = vmatpush1.msra.mxu0 %v203
    %236 = vmatprep.subr.mxu0 0.0
    %237 = vmatpush1.msra.mxu0 %v204
    %238 = vmatprep.subr.mxu0 0.0
    %239 = vmatpush1.msra.mxu0 %v205
    %240 = vmatprep.subr.mxu0 0.0
    %241 = vmatpush1.msra.mxu0 %v206
    %242 = vmatprep.subr.mxu0 0.0
    %243 = vmatpush1.msra.mxu0 %v207
    %244 = vmatprep.subr.mxu0 0.0
    %245 = vmatpush1.msra.mxu0 %v208
    %246 = vmatprep.subr.mxu0 0.0
    %247 = vmatpush1.msra.mxu0 %v209
    %248 = vmatprep.subr.mxu0 0.0
    %249 = vmatpush1.msra.mxu0 %v210
    %250 = vmatprep.subr.mxu0 0.0
    %251 = vmatpush1.msra.mxu0 %v211
    %252 = vmatprep.subr.mxu0 0.0
    %253 = vmatpush1.msra.mxu0 0.0
    %254 = vmatprep.subr.mxu0 0.0
    %255 = vmatpush1.msra.mxu0 0.0
    %256 = vmatprep.subr.mxu0 0.0
    %257 = vmatpush1.msra.mxu0 0.0
    %258 = vmatprep.subr.mxu0 0.0
    %259 = vmatpush1.msra.mxu0 0.0
    %260 = vmatprep.subr.mxu0 0.0
    %261 = vmatpush1.msra.mxu0 0.0
    %262 = vmatprep.subr.mxu0 0.0
    %263 = vmatpush1.msra.mxu0 0.0
    %264 = vmatprep.subr.mxu0 0.0
    %265 = vmatpush1.msra.mxu0 0.0
    %266 = vmatprep.subr.mxu0 0.0
    %267 = vmatpush1.msra.mxu0 0.0
    %268 = vmatprep.subr.mxu0 0.0
    %269 = vmatpush1.msra.mxu0 0.0
    %270 = vmatprep.subr.mxu0 0.0
    %271 = vmatpush1.msra.mxu0 0.0
    %272 = vmatprep.subr.mxu0 0.0
    %273 = vmatpush1.msra.mxu0 0.0
    %274 = vmatprep.subr.mxu0 0.0
    %275 = vmatpush1.msra.mxu0 0.0
    %276 = vmatprep.subr.mxu0 0.0
    %277 = vmatpush1.msra.mxu0 0.0
    %278 = vmatprep.subr.mxu0 0.0
    %279 = vmatpush1.msra.mxu0 0.0
    %280 = vmatprep.subr.mxu0 0.0
    %281 = vmatpush1.msra.mxu0 0.0
    %282 = vmatprep.subr.mxu0 0.0
    %283 = vmatpush1.msra.mxu0 0.0
    %284 = vmatprep.mubr.f32.mxu0 0.0
    %285 = vmatmul.mubr.f32.gmra.mrb[0].mxu0 %v194
    %v286 = vpop.f32.mrb[0].mxu0
    %v287 = vadd.f32 %v218, %v286
    %v288 = vpop.f32.mrb[0].mxu0
    %289 = vdwg.mxu0
    %s290 = scalar_lea.vmem %s5, 1
    %v291 = vld [vmem:[%s290] sm:$0x1]
    %v293 = vlaneseq
    %v294 = vshrl.u32 %v293, 7
    %v295 = vsub.s32 0, %v294
    %v296 = vrot.slane %v291, %v295
    %v298 = vmul.f32 %v296, %v287
    %v299 = vxor.u32 %v298, 2147483648
    %v300 = vmul.f32 %v299, 1.442695
    %v301 = vpow.pop %v300
    %v302 = vadd.f32 %v301, 1.0
    %v303 = vrcp.pop %v302
    %v304 = vmul.f32 1.0, %v303
    %s305 = scalar_lea.vmem %s6, 1
    %v306 = vld [vmem:[%s305] sm:$0x1]
    %s307 = scalar_lea.vmem %s7, 1
    %v308 = vld [vmem:[%s307] sm:$0x1]
    %v310 = vlaneseq
    %v311 = vshrl.u32 %v310, 7
    %v312 = vsub.s32 0, %v311
    %v313 = vrot.slane %v308, %v312
    %v315 = vmul.f32 %v304, %v313
    %v317 = vlaneseq
    %v318 = vshrl.u32 %v317, 7
    %v319 = vsub.s32 0, %v318
    %v320 = vrot.slane %v306, %v319
    %v322 = vadd.f32 %v320, %v315
    %v323 = vmul.f32 %v322, %v287
    %v324 = vadd.f32 %v323, %v192
    %s325 = scalar_lea.vmem [#allocation9], 8
    %326 = vst [vmem:[%s325] sm:$0xff] %v324
    // Predicated region
    $region42: #{tpu_custom_call.1} parent=1 // pred_check
      _
    $region43: #{tpu_custom_call.1} parent=1 // pred_check_branch
      %328 = sbr.rel (0) target = $region45
    $region44: #{tpu_custom_call.1} parent=1 // pred_region
      %s330 = ssub.s32 256, 256
      %331 = vsyncadd [#allocation6], %s330
      %s333 = sshll.u32 [#allocation9], 4
      %s334 = int_to_ptr.vmem [resolvable:$true] %s333
      %336 = dma.vmem_to_hbm [thread:$0]  %s334, 256, %s8, [#allocation6]
    $region45: #{tpu_custom_call.1} parent=1 // pred_fallthru
      _
    // Predicated region
    $region46: #{tpu_custom_call.1} parent=1 // pred_check
      _
    $region47: #{tpu_custom_call.1} parent=1 // pred_check_branch
      %338 = sbr.rel (0) target = $region49
    $region48: #{tpu_custom_call.1} parent=1 // pred_region
      %339 = dma.done [#allocation6], 256
    $region49: #{tpu_custom_call.1} parent=1 // pred_fallthru
      _
    %340 = vsyncpa [#allocation5], 1
    %341 = vsyncpa [#allocation8], 1
    %342 = vsyncpa [#allocation6], 1

// kernel: tpu_custom_call.1
$region0: #{tpu_custom_call.1}
  #allocation0 [shape = 'u32[]', space=smem, size = 0x4, offset = 0x4, fixed_abs, tag = 'smem constant byte address 0x4 - core index']
  #allocation1 [shape = 'u32[144,128]{1,0:T(1,128)}', space=vmem, size = 0x12000, scoped, tag = 'internal scratch']
  #allocation2 [shape = 'f32[1]{0:T(128)S(6)}', space=smem, size = 0x200, scoped, tag = 'scoped memory for tpu_custom_call.1']
  #allocation3 [shape = 'f32[1]{0:T(128)S(6)}', space=smem, size = 0x200, scoped, tag = 'scoped memory for tpu_custom_call.1']
  %s0 = inlined_call_operand.<no memory space> [shape: f32[1], index: 0, kind: input, shape index: {}]
  %s1 = inlined_call_operand.<no memory space> [shape: f32[1], index: 1, kind: input, shape index: {}]
  %s2 = inlined_call_operand.hbm [shape: f32[8,256], index: 2, kind: input, shape index: {}]
  %s3 = inlined_call_operand.hbm [shape: f32[2,128,128], index: 3, kind: input, shape index: {}]
  %s4 = inlined_call_operand.vmem [shape: f32[1,256], index: 4, kind: input, shape index: {}]
  %s5 = inlined_call_operand.vmem [shape: f32[1,256], index: 5, kind: input, shape index: {}]
  %s6 = inlined_call_operand.vmem [shape: f32[1,256], index: 6, kind: input, shape index: {}]
  %s7 = inlined_call_operand.vmem [shape: f32[1,256], index: 7, kind: input, shape index: {}]
  %s8 = inlined_call_operand.hbm [shape: f32[8,256], index: 8, kind: output, shape index: {}]
  %s9 = sld [smem:[#allocation0]]
  $region50: #{tpu_custom_call.1} parent=0
    _
  %s11 = ssub.s32 1, %s9
  %s12 = scalar_select 0, %s11, %s9
  %13 = sst [smem:[#allocation2]] %s0
  %14 = sst [smem:[#allocation3]] %s1
  $region1: #{tpu_custom_call.1} parent=0
    #allocation4 [shape = 'u8[8192]{0}', space=vmem, size = 0x2000, scoped, tag = 'input window, operand 2, single buffered']
    #allocation5 [shape = 's32[1]{0}', space=sflag, size = 0x4, scoped, tag = 'scoped memory for tpu_custom_call.1']
    #allocation6 [shape = 's32[1]{0}', space=sflag, size = 0x4, scoped, tag = 'scoped memory for tpu_custom_call.1']
    #allocation7 [shape = 'u8[131072]{0}', space=vmem, size = 0x20000, scoped, tag = 'input window, operand 3, single buffered']
    #allocation8 [shape = 's32[1]{0}', space=sflag, size = 0x4, scoped, tag = 'scoped memory for tpu_custom_call.1']
    #allocation9 [shape = 'u8[8192]{0}', space=vmem, size = 0x2000, scoped, tag = 'output window, operand 0, single buffered']
    %15 = vsyncpa [#allocation5], 0
    %16 = vsyncpa [#allocation8], 0
    %17 = vsyncpa [#allocation6], 0
    // Predicated region
    $region2: #{tpu_custom_call.1} parent=1 // pred_check
      _
    $region3: #{tpu_custom_call.1} parent=1 // pred_check_branch
      %19 = sbr.rel (0) target = $region5
    $region4: #{tpu_custom_call.1} parent=1 // pred_region
      _
    $region5: #{tpu_custom_call.1} parent=1 // pred_fallthru
      _
    // Predicated region
    $region6: #{tpu_custom_call.1} parent=1 // pred_check
      _
    $region7: #{tpu_custom_call.1} parent=1 // pred_check_branch
      %21 = sbr.rel (0) target = $region9
    $region8: #{tpu_custom_call.1} parent=1 // pred_region
      _
    $region9: #{tpu_custom_call.1} parent=1 // pred_fallthru
      _
    // Predicated region
    $region10: #{tpu_custom_call.1} parent=1 // pred_check
      _
    $region11: #{tpu_custom_call.1} parent=1 // pred_check_branch
      %23 = sbr.rel (0) target = $region13
    $region12: #{tpu_custom_call.1} parent=1 // pred_region
      %s25 = ssub.s32 256, 256
      %26 = vsyncadd [#allocation5], %s25
      %s28 = sshll.u32 [#allocation4], 4
      %s29 = int_to_ptr.vmem [resolvable:$true] %s28
      %31 = dma.hbm_to_vmem [thread:$0]  %s2, 256, %s29, [#allocation5]
    $region13: #{tpu_custom_call.1} parent=1 // pred_fallthru
      _
    // Predicated region
    $region14: #{tpu_custom_call.1} parent=1 // pred_check
      _
    $region15: #{tpu_custom_call.1} parent=1 // pred_check_branch
      %33 = sbr.rel (0) target = $region17
    $region16: #{tpu_custom_call.1} parent=1 // pred_region
      %s35 = ssub.s32 4096, 4096
      %36 = vsyncadd [#allocation8], %s35
      %s37 = sshll.u32 [#allocation7], 4
      %s38 = int_to_ptr.vmem [resolvable:$true] %s37
      %43 = dma.hbm_to_vmem [thread:$0]  %s3, 4096, %s38, [#allocation8], 128, 128, 8
    $region17: #{tpu_custom_call.1} parent=1 // pred_fallthru
      _
    // Predicated region
    $region18: #{tpu_custom_call.1} parent=1 // pred_check
      _
    $region19: #{tpu_custom_call.1} parent=1 // pred_check_branch
      %45 = sbr.rel (0) target = $region21
    $region20: #{tpu_custom_call.1} parent=1 // pred_region
      _
    $region21: #{tpu_custom_call.1} parent=1 // pred_fallthru
      _
    // Predicated region
    $region22: #{tpu_custom_call.1} parent=1 // pred_check
      _
    $region23: #{tpu_custom_call.1} parent=1 // pred_check_branch
      %47 = sbr.rel (0) target = $region25
    $region24: #{tpu_custom_call.1} parent=1 // pred_region
      _
    $region25: #{tpu_custom_call.1} parent=1 // pred_fallthru
      _
    // Predicated region
    $region26: #{tpu_custom_call.1} parent=1 // pred_check
      _
    $region27: #{tpu_custom_call.1} parent=1 // pred_check_branch
      %49 = sbr.rel (0) target = $region29
    $region28: #{tpu_custom_call.1} parent=1 // pred_region
      _
    $region29: #{tpu_custom_call.1} parent=1 // pred_fallthru
      _
    // Predicated region
    $region30: #{tpu_custom_call.1} parent=1 // pred_check
      _
    $region31: #{tpu_custom_call.1} parent=1 // pred_check_branch
      %51 = sbr.rel (0) target = $region33
    $region32: #{tpu_custom_call.1} parent=1 // pred_region
      _
    $region33: #{tpu_custom_call.1} parent=1 // pred_fallthru
      _
    // Predicated region
    $region34: #{tpu_custom_call.1} parent=1 // pred_check
      _
    $region35: #{tpu_custom_call.1} parent=1 // pred_check_branch
      %53 = sbr.rel (0) target = $region37
    $region36: #{tpu_custom_call.1} parent=1 // pred_region
      %54 = dma.done [#allocation5], 256
    $region37: #{tpu_custom_call.1} parent=1 // pred_fallthru
      _
    // Predicated region
    $region38: #{tpu_custom_call.1} parent=1 // pred_check
      _
    $region39: #{tpu_custom_call.1} parent=1 // pred_check_branch
      %56 = sbr.rel (0) target = $region41
    $region40: #{tpu_custom_call.1} parent=1 // pred_region
      %57 = dma.done [#allocation8], 4096
    $region41: #{tpu_custom_call.1} parent=1 // pred_fallthru
      _
    %s58 = sld [smem:[#allocation2]]
    %s59 = sld [smem:[#allocation3]]
    %v60 = vld [vmem:[#allocation4] sm:$0xff]
    %v61 = vstv %s58
    %v62 = vmul.f32 %v60, %v61
    %v63 = vstv %s59
    %v64 = vadd.f32 %v62, %v63
    %v65 = vld [vmem:[#allocation7] sm:$0xff]
    %v66 = vld [vmem:[#allocation7 + $0x8] sm:$0xff]
    %v67 = vld [vmem:[#allocation7 + $0x10] sm:$0xff]
    %v68 = vld [vmem:[#allocation7 + $0x18] sm:$0xff]
    %v69 = vld [vmem:[#allocation7 + $0x20] sm:$0xff]
    %v70 = vld [vmem:[#allocation7 + $0x28] sm:$0xff]
    %v71 = vld [vmem:[#allocation7 + $0x30] sm:$0xff]
    %v72 = vld [vmem:[#allocation7 + $0x38] sm:$0xff]
    %v73 = vld [vmem:[#allocation7 + $0x40] sm:$0xff]
    %v74 = vld [vmem:[#allocation7 + $0x48] sm:$0xff]
    %v75 = vld [vmem:[#allocation7 + $0x50] sm:$0xff]
    %v76 = vld [vmem:[#allocation7 + $0x58] sm:$0xff]
    %v77 = vld [vmem:[#allocation7 + $0x60] sm:$0xff]
    %v78 = vld [vmem:[#allocation7 + $0x68] sm:$0xff]
    %v79 = vld [vmem:[#allocation7 + $0x70] sm:$0xff]
    %v80 = vld [vmem:[#allocation7 + $0x78] sm:$0xff]
    %v81 = vld [vmem:[%s4] sm:$0x1]
    %v83 = vlaneseq
    %v84 = vshrl.u32 %v83, 7
    %v85 = vsub.s32 0, %v84
    %v86 = vrot.slane %v81, %v85
    %88 = vmatprep.subr.mxu0 0.0
    %89 = vmatpush1.msra.mxu0 %v65
    %90 = vmatprep.subr.mxu0 0.0
    %91 = vmatpush1.msra.mxu0 %v66
    %92 = vmatprep.subr.mxu0 0.0
    %93 = vmatpush1.msra.mxu0 %v67
    %94 = vmatprep.subr.mxu0 0.0
    %95 = vmatpush1.msra.mxu0 %v68
    %96 = vmatprep.subr.mxu0 0.0
    %97 = vmatpush1.msra.mxu0 %v69
    %98 = vmatprep.subr.mxu0 0.0
    %99 = vmatpush1.msra.mxu0 %v70
    %100 = vmatprep.subr.mxu0 0.0
    %101 = vmatpush1.msra.mxu0 %v71
    %102 = vmatprep.subr.mxu0 0.0
    %103 = vmatpush1.msra.mxu0 %v72
    %104 = vmatprep.subr.mxu0 0.0
    %105 = vmatpush1.msra.mxu0 %v73
    %106 = vmatprep.subr.mxu0 0.0
    %107 = vmatpush1.msra.mxu0 %v74
    %108 = vmatprep.subr.mxu0 0.0
    %109 = vmatpush1.msra.mxu0 %v75
    %110 = vmatprep.subr.mxu0 0.0
    %111 = vmatpush1.msra.mxu0 %v76
    %112 = vmatprep.subr.mxu0 0.0
    %113 = vmatpush1.msra.mxu0 %v77
    %114 = vmatprep.subr.mxu0 0.0
    %115 = vmatpush1.msra.mxu0 %v78
    %116 = vmatprep.subr.mxu0 0.0
    %117 = vmatpush1.msra.mxu0 %v79
    %118 = vmatprep.subr.mxu0 0.0
    %119 = vmatpush1.msra.mxu0 %v80
    %120 = vmatprep.subr.mxu0 0.0
    %121 = vmatpush1.msra.mxu0 0.0
    %122 = vmatprep.subr.mxu0 0.0
    %123 = vmatpush1.msra.mxu0 0.0
    %124 = vmatprep.subr.mxu0 0.0
    %125 = vmatpush1.msra.mxu0 0.0
    %126 = vmatprep.subr.mxu0 0.0
    %127 = vmatpush1.msra.mxu0 0.0
    %128 = vmatprep.subr.mxu0 0.0
    %129 = vmatpush1.msra.mxu0 0.0
    %130 = vmatprep.subr.mxu0 0.0
    %131 = vmatpush1.msra.mxu0 0.0
    %132 = vmatprep.subr.mxu0 0.0
    %133 = vmatpush1.msra.mxu0 0.0
    %134 = vmatprep.subr.mxu0 0.0
    %135 = vmatpush1.msra.mxu0 0.0
    %136 = vmatprep.subr.mxu0 0.0
    %137 = vmatpush1.msra.mxu0 0.0
    %138 = vmatprep.subr.mxu0 0.0
    %139 = vmatpush1.msra.mxu0 0.0
    %140 = vmatprep.subr.mxu0 0.0
    %141 = vmatpush1.msra.mxu0 0.0
    %142 = vmatprep.subr.mxu0 0.0
    %143 = vmatpush1.msra.mxu0 0.0
    %144 = vmatprep.subr.mxu0 0.0
    %145 = vmatpush1.msra.mxu0 0.0
    %146 = vmatprep.subr.mxu0 0.0
    %147 = vmatpush1.msra.mxu0 0.0
    %148 = vmatprep.subr.mxu0 0.0
    %149 = vmatpush1.msra.mxu0 0.0
    %150 = vmatprep.subr.mxu0 0.0
    %151 = vmatpush1.msra.mxu0 0.0
    %152 = vmatprep.mubr.f32.mxu0 0.0
    %153 = vmatmul.mubr.f32.gmra.mrb[0].mxu0 %v64
    %v154 = vpop.f32.mrb[0].mxu0
    %v155 = vadd.f32 %v86, %v154
    %v156 = vpop.f32.mrb[0].mxu0
    %157 = vdwg.mxu0
    %v158 = vld [vmem:[%s5] sm:$0x1]
    %v160 = vlaneseq
    %v161 = vshrl.u32 %v160, 7
    %v162 = vsub.s32 0, %v161
    %v163 = vrot.slane %v158, %v162
    %v165 = vmul.f32 %v163, %v155
    %v166 = vxor.u32 %v165, 2147483648
    %v167 = vmul.f32 %v166, 1.442695
    %v168 = vpow.pop %v167
    %v169 = vadd.f32 %v168, 1.0
    %v170 = vrcp.pop %v169
    %v171 = vmul.f32 1.0, %v170
    %v172 = vld [vmem:[%s6] sm:$0x1]
    %v173 = vld [vmem:[%s7] sm:$0x1]
    %v175 = vlaneseq
    %v176 = vshrl.u32 %v175, 7
    %v177 = vsub.s32 0, %v176
    %v178 = vrot.slane %v173, %v177
    %v180 = vmul.f32 %v171, %v178
    %v182 = vlaneseq
    %v183 = vshrl.u32 %v182, 7
    %v184 = vsub.s32 0, %v183
    %v185 = vrot.slane %v172, %v184
    %v187 = vadd.f32 %v185, %v180
    %v188 = vmul.f32 %v187, %v155
    %v189 = vadd.f32 %v188, %v60
    %190 = vst [vmem:[#allocation9] sm:$0xff] %v189
    %v191 = vld [vmem:[#allocation4 + $0x8] sm:$0xff]
    %v192 = vmul.f32 %v191, %v61
    %v193 = vadd.f32 %v192, %v63
    %s194 = scalar_lea.vmem [#allocation7], 128
    %v195 = vld [vmem:[%s194] sm:$0xff]
    %v196 = vld [vmem:[%s194 + $0x8] sm:$0xff]
    %v197 = vld [vmem:[%s194 + $0x10] sm:$0xff]
    %v198 = vld [vmem:[%s194 + $0x18] sm:$0xff]
    %v199 = vld [vmem:[%s194 + $0x20] sm:$0xff]
    %v200 = vld [vmem:[%s194 + $0x28] sm:$0xff]
    %v201 = vld [vmem:[%s194 + $0x30] sm:$0xff]
    %v202 = vld [vmem:[%s194 + $0x38] sm:$0xff]
    %v203 = vld [vmem:[%s194 + $0x40] sm:$0xff]
    %v204 = vld [vmem:[%s194 + $0x48] sm:$0xff]
    %v205 = vld [vmem:[%s194 + $0x50] sm:$0xff]
    %v206 = vld [vmem:[%s194 + $0x58] sm:$0xff]
    %v207 = vld [vmem:[%s194 + $0x60] sm:$0xff]
    %v208 = vld [vmem:[%s194 + $0x68] sm:$0xff]
    %v209 = vld [vmem:[%s194 + $0x70] sm:$0xff]
    %v210 = vld [vmem:[%s194 + $0x78] sm:$0xff]
    %v211 = vld [vmem:[%s4 + $0x1] sm:$0x1]
    %v213 = vlaneseq
    %v214 = vshrl.u32 %v213, 7
    %v215 = vsub.s32 0, %v214
    %v216 = vrot.slane %v211, %v215
    %218 = vmatprep.subr.mxu0 0.0
    %219 = vmatpush1.msra.mxu0 %v195
    %220 = vmatprep.subr.mxu0 0.0
    %221 = vmatpush1.msra.mxu0 %v196
    %222 = vmatprep.subr.mxu0 0.0
    %223 = vmatpush1.msra.mxu0 %v197
    %224 = vmatprep.subr.mxu0 0.0
    %225 = vmatpush1.msra.mxu0 %v198
    %226 = vmatprep.subr.mxu0 0.0
    %227 = vmatpush1.msra.mxu0 %v199
    %228 = vmatprep.subr.mxu0 0.0
    %229 = vmatpush1.msra.mxu0 %v200
    %230 = vmatprep.subr.mxu0 0.0
    %231 = vmatpush1.msra.mxu0 %v201
    %232 = vmatprep.subr.mxu0 0.0
    %233 = vmatpush1.msra.mxu0 %v202
    %234 = vmatprep.subr.mxu0 0.0
    %235 = vmatpush1.msra.mxu0 %v203
    %236 = vmatprep.subr.mxu0 0.0
    %237 = vmatpush1.msra.mxu0 %v204
    %238 = vmatprep.subr.mxu0 0.0
    %239 = vmatpush1.msra.mxu0 %v205
    %240 = vmatprep.subr.mxu0 0.0
    %241 = vmatpush1.msra.mxu0 %v206
    %242 = vmatprep.subr.mxu0 0.0
    %243 = vmatpush1.msra.mxu0 %v207
    %244 = vmatprep.subr.mxu0 0.0
    %245 = vmatpush1.msra.mxu0 %v208
    %246 = vmatprep.subr.mxu0 0.0
    %247 = vmatpush1.msra.mxu0 %v209
    %248 = vmatprep.subr.mxu0 0.0
    %249 = vmatpush1.msra.mxu0 %v210
    %250 = vmatprep.subr.mxu0 0.0
    %251 = vmatpush1.msra.mxu0 0.0
    %252 = vmatprep.subr.mxu0 0.0
    %253 = vmatpush1.msra.mxu0 0.0
    %254 = vmatprep.subr.mxu0 0.0
    %255 = vmatpush1.msra.mxu0 0.0
    %256 = vmatprep.subr.mxu0 0.0
    %257 = vmatpush1.msra.mxu0 0.0
    %258 = vmatprep.subr.mxu0 0.0
    %259 = vmatpush1.msra.mxu0 0.0
    %260 = vmatprep.subr.mxu0 0.0
    %261 = vmatpush1.msra.mxu0 0.0
    %262 = vmatprep.subr.mxu0 0.0
    %263 = vmatpush1.msra.mxu0 0.0
    %264 = vmatprep.subr.mxu0 0.0
    %265 = vmatpush1.msra.mxu0 0.0
    %266 = vmatprep.subr.mxu0 0.0
    %267 = vmatpush1.msra.mxu0 0.0
    %268 = vmatprep.subr.mxu0 0.0
    %269 = vmatpush1.msra.mxu0 0.0
    %270 = vmatprep.subr.mxu0 0.0
    %271 = vmatpush1.msra.mxu0 0.0
    %272 = vmatprep.subr.mxu0 0.0
    %273 = vmatpush1.msra.mxu0 0.0
    %274 = vmatprep.subr.mxu0 0.0
    %275 = vmatpush1.msra.mxu0 0.0
    %276 = vmatprep.subr.mxu0 0.0
    %277 = vmatpush1.msra.mxu0 0.0
    %278 = vmatprep.subr.mxu0 0.0
    %279 = vmatpush1.msra.mxu0 0.0
    %280 = vmatprep.subr.mxu0 0.0
    %281 = vmatpush1.msra.mxu0 0.0
    %282 = vmatprep.mubr.f32.mxu0 0.0
    %283 = vmatmul.mubr.f32.gmra.mrb[0].mxu0 %v193
    %v284 = vpop.f32.mrb[0].mxu0
    %v285 = vadd.f32 %v216, %v284
    %v286 = vpop.f32.mrb[0].mxu0
    %287 = vdwg.mxu0
    %v288 = vld [vmem:[%s5 + $0x1] sm:$0x1]
    %v290 = vlaneseq
    %v291 = vshrl.u32 %v290, 7
    %v292 = vsub.s32 0, %v291
    %v293 = vrot.slane %v288, %v292
    %v295 = vmul.f32 %v293, %v285
    %v296 = vxor.u32 %v295, 2147483648
    %v297 = vmul.f32 %v296, 1.442695
    %v298 = vpow.pop %v297
    %v299 = vadd.f32 %v298, 1.0
    %v300 = vrcp.pop %v299
    %v301 = vmul.f32 1.0, %v300
    %v302 = vld [vmem:[%s6 + $0x1] sm:$0x1]
    %v303 = vld [vmem:[%s7 + $0x1] sm:$0x1]
    %v305 = vlaneseq
    %v306 = vshrl.u32 %v305, 7
    %v307 = vsub.s32 0, %v306
    %v308 = vrot.slane %v303, %v307
    %v310 = vmul.f32 %v301, %v308
    %v312 = vlaneseq
    %v313 = vshrl.u32 %v312, 7
    %v314 = vsub.s32 0, %v313
    %v315 = vrot.slane %v302, %v314
    %v317 = vadd.f32 %v315, %v310
    %v318 = vmul.f32 %v317, %v285
    %v319 = vadd.f32 %v318, %v191
    %320 = vst [vmem:[#allocation9 + $0x8] sm:$0xff] %v319
    // Predicated region
    $region42: #{tpu_custom_call.1} parent=1 // pred_check
      _
    $region43: #{tpu_custom_call.1} parent=1 // pred_check_branch
      %322 = sbr.rel (0) target = $region45
    $region44: #{tpu_custom_call.1} parent=1 // pred_region
      %s324 = ssub.s32 256, 256
      %325 = vsyncadd [#allocation6], %s324
      %s327 = sshll.u32 [#allocation9], 4
      %s328 = int_to_ptr.vmem [resolvable:$true] %s327
      %330 = dma.vmem_to_hbm [thread:$0]  %s328, 256, %s8, [#allocation6]
    $region45: #{tpu_custom_call.1} parent=1 // pred_fallthru
      _
    // Predicated region
    $region46: #{tpu_custom_call.1} parent=1 // pred_check
      _
    $region47: #{tpu_custom_call.1} parent=1 // pred_check_branch
      %332 = sbr.rel (0) target = $region49
    $region48: #{tpu_custom_call.1} parent=1 // pred_region
      %333 = dma.done [#allocation6], 256
    $region49: #{tpu_custom_call.1} parent=1 // pred_fallthru
      _
    %334 = vsyncpa [#allocation5], 1
    %335 = vsyncpa [#allocation8], 1
    %336 = vsyncpa [#allocation6], 1

// kernel: tpu_custom_call.1
$region0: #{tpu_custom_call.1}
  #allocation0 [shape = 'u32[]', space=smem, size = 0x4, offset = 0x4, fixed_abs, tag = 'smem constant byte address 0x4 - core index']
  #allocation1 [shape = 'u32[144,128]{1,0:T(1,128)}', space=vmem, size = 0x12000, scoped, tag = 'internal scratch']
  #allocation2 [shape = 'f32[1]{0:T(128)S(6)}', space=smem, size = 0x200, scoped, tag = 'scoped memory for tpu_custom_call.1']
  #allocation3 [shape = 'f32[1]{0:T(128)S(6)}', space=smem, size = 0x200, scoped, tag = 'scoped memory for tpu_custom_call.1']
  %s0 = inlined_call_operand.<no memory space> [shape: f32[1], index: 0, kind: input, shape index: {}]
  %s1 = inlined_call_operand.<no memory space> [shape: f32[1], index: 1, kind: input, shape index: {}]
  %s2 = inlined_call_operand.hbm [shape: f32[8,256], index: 2, kind: input, shape index: {}]
  %s3 = inlined_call_operand.hbm [shape: f32[2,128,128], index: 3, kind: input, shape index: {}]
  %s4 = inlined_call_operand.vmem [shape: f32[1,256], index: 4, kind: input, shape index: {}]
  %s5 = inlined_call_operand.vmem [shape: f32[1,256], index: 5, kind: input, shape index: {}]
  %s6 = inlined_call_operand.vmem [shape: f32[1,256], index: 6, kind: input, shape index: {}]
  %s7 = inlined_call_operand.vmem [shape: f32[1,256], index: 7, kind: input, shape index: {}]
  %s8 = inlined_call_operand.hbm [shape: f32[8,256], index: 8, kind: output, shape index: {}]
  %s9 = sld [smem:[#allocation0]]
  $region73: #{tpu_custom_call.1} parent=0
    _
  %s11 = ssub.s32 1, %s9
  %s12 = scalar_select 0, %s11, %s9
  %13 = sst [smem:[#allocation2]] %s0
  %14 = sst [smem:[#allocation3]] %s1
  $region1: #{tpu_custom_call.1} parent=0
    #allocation4 [shape = 'u8[8192]{0}', space=vmem, size = 0x2000, scoped, tag = 'input window, operand 2']
    #allocation5 [shape = 's32[2]{0}', space=sflag, size = 0x8, scoped, tag = 'scoped memory for tpu_custom_call.1']
    #allocation6 [shape = 's32[2]{0}', space=sflag, size = 0x8, scoped, tag = 'scoped memory for tpu_custom_call.1']
    #allocation7 [shape = 'u8[131072]{0}', space=vmem, size = 0x20000, scoped, tag = 'input window, operand 3']
    #allocation8 [shape = 's32[2]{0}', space=sflag, size = 0x8, scoped, tag = 'scoped memory for tpu_custom_call.1']
    #allocation9 [shape = 'u8[8192]{0}', space=vmem, size = 0x2000, scoped, tag = 'output window, operand 0']
    %15 = vsyncpa [#allocation5], 0
    %s16 = scalar_lea.sflag [#allocation5], 1
    %17 = vsyncpa %s16, 0
    %18 = vsyncpa [#allocation8], 0
    %s19 = scalar_lea.sflag [#allocation8], 1
    %20 = vsyncpa %s19, 0
    %21 = vsyncpa [#allocation6], 0
    %s22 = scalar_lea.sflag [#allocation6], 1
    %23 = vsyncpa %s22, 0
    loop: start=0, step=1, limit=4
    $region2: #{tpu_custom_call.1} parent=1 // loop_pre_header
      _
    $region3: #{tpu_custom_call.1} parent=1 // loop_header
      %s25 = sphi 0, %s29
      %p26 = scmp.ge.s32.totalorder %s25, 4
      %s32 = sphi 0, %s44
      %s33 = sphi 0, %s40
      %s34 = sphi 0, %s32
      %s35 = sphi 0, %s33
      %s36 = sphi 0, %s34
      %s37 = sphi 0, %s35
      %s45 = sphi 0, %s45
      %s47 = sphi 0, %s45
      %s48 = sphi 0, %s47
      %s62 = sphi 0, %s48
      %s66 = sphi 0, %s66
      %s68 = sphi 0, %s66
      %s69 = sphi 0, %s68
      %s83 = sphi 0, %s69
      %s91 = sphi 0, %s93
      %s94 = sphi 0, %s91
      %s95 = sphi 0, %s94
      %s111 = sphi 0, %s95
      %s117 = sphi 0, %s119
      %s120 = sphi 0, %s117
      %s121 = sphi 0, %s120
      %s137 = sphi 0, %s121
      %s143 = sphi 0, %s145
      %s146 = sphi 0, %s143
      %s147 = sphi 0, %s146
      %s163 = sphi 0, %s147
      %s169 = sphi 0, %s171
      %s172 = sphi 0, %s169
      %s173 = sphi 0, %s172
      %s189 = sphi 0, %s173
      %s195 = sphi 0, %s197
      %s198 = sphi 0, %s195
      %s199 = sphi 0, %s198
      %s215 = sphi 0, %s199
      %s221 = sphi 0, %s223
      %s224 = sphi 0, %s221
      %s225 = sphi 0, %s224
      %s241 = sphi 0, %s225
      %s249 = sphi 0, %s251
      %s252 = sphi 0, %s249
      %s253 = sphi 0, %s252
      %s269 = sphi 0, %s253
    $region4: #{tpu_custom_call.1} parent=1 // loop_header_branch
      %28 = sbr.rel (%p26) target = $region8
    $region5: #{tpu_custom_call.1} parent=1 // loop_body
      %s30 = ssub.s32 %s25, 1
      %s31 = ssub.s32 %s25, 2
      %s38 = sadd.s32 1, %s33
      %p39 = scmp.ge.s32.totalorder %s38, 1
      %s40 = scalar_select %p39, 0, %s38
      %s41 = sadd.s32 1, %s32
      %s42 = scalar_select %p39, %s41, %s32
      %p43 = scmp.ge.s32.totalorder %s42, 2
      %s44 = scalar_select %p43, 0, %s42
      %s46 = sadd.s32 %s45, 1
      %p49 = scmp.eq.s32.totalorder %s25, 1
      %p50 = scmp.ne.s32.totalorder %s45, %s47
      %p51 = scmp.eq.s32.totalorder %s25, 0
      %p52 = por %p50, %p51
      %p53 = scmp.ne.s32.totalorder %s45, %s47
      %p54 = scmp.eq.s32.totalorder %s30, 1
      %p55 = por %p53, %p54
      %p56 = scmp.ne.s32.totalorder %s47, %s48
      %p57 = scmp.eq.s32.totalorder %s30, 0
      %p58 = por %p56, %p57
      %p59 = scmp.ne.s32.totalorder %s47, %s48
      %p60 = scmp.eq.s32.totalorder %s31, 1
      %p61 = por %p59, %p60
      %p63 = scmp.ne.s32.totalorder %s48, %s62
      %p64 = scmp.eq.s32.totalorder %s31, 0
      %p65 = por %p63, %p64
      %s67 = sadd.s32 %s66, 1
      %p70 = scmp.eq.s32.totalorder %s25, 1
      %p71 = scmp.ne.s32.totalorder %s66, %s68
      %p72 = scmp.eq.s32.totalorder %s25, 0
      %p73 = por %p71, %p72
      %p74 = scmp.ne.s32.totalorder %s66, %s68
      %p75 = scmp.eq.s32.totalorder %s30, 1
      %p76 = por %p74, %p75
      %p77 = scmp.ne.s32.totalorder %s68, %s69
      %p78 = scmp.eq.s32.totalorder %s30, 0
      %p79 = por %p77, %p78
      %p80 = scmp.ne.s32.totalorder %s68, %s69
      %p81 = scmp.eq.s32.totalorder %s31, 1
      %p82 = por %p80, %p81
      %p84 = scmp.ne.s32.totalorder %s69, %s83
      %p85 = scmp.eq.s32.totalorder %s31, 0
      %p86 = por %p84, %p85
      %s87 = ssub.s32 %s33, %s40
      %s88 = ssub.s32 %s32, %s44
      %s89 = sor.u32 %s87, %s88
      %p90 = scmp.eq.s32.totalorder %s89, 0
      %s92 = sadd.s32 %s91, 1
      %s93 = scalar_select %p90, %s91, %s92
      %p96 = pneg %p90
      %p97 = scmp.eq.s32.totalorder %s25, 1
      %p98 = por %p96, %p97
      %p99 = scmp.ne.s32.totalorder %s91, %s94
      %p100 = scmp.eq.s32.totalorder %s25, 0
      %p101 = por %p99, %p100
      %p102 = scmp.ne.s32.totalorder %s91, %s94
      %p103 = scmp.eq.s32.totalorder %s30, 1
      %p104 = por %p102, %p103
      %p105 = scmp.ne.s32.totalorder %s94, %s95
      %p106 = scmp.eq.s32.totalorder %s30, 0
      %p107 = por %p105, %p106
      %p108 = scmp.ne.s32.totalorder %s94, %s95
      %p109 = scmp.eq.s32.totalorder %s31, 1
      %p110 = por %p108, %p109
      %p112 = scmp.ne.s32.totalorder %s95, %s111
      %p113 = scmp.eq.s32.totalorder %s31, 0
      %p114 = por %p112, %p113
      %s115 = ssub.s32 %s32, %s44
      %p116 = scmp.eq.s32.totalorder %s115, 0
      %s118 = sadd.s32 %s117, 1
      %s119 = scalar_select %p116, %s117, %s118
      %p122 = pneg %p116
      %p123 = scmp.eq.s32.totalorder %s25, 1
      %p124 = por %p122, %p123
      %p125 = scmp.ne.s32.totalorder %s117, %s120
      %p126 = scmp.eq.s32.totalorder %s25, 0
      %p127 = por %p125, %p126
      %p128 = scmp.ne.s32.totalorder %s117, %s120
      %p129 = scmp.eq.s32.totalorder %s30, 1
      %p130 = por %p128, %p129
      %p131 = scmp.ne.s32.totalorder %s120, %s121
      %p132 = scmp.eq.s32.totalorder %s30, 0
      %p133 = por %p131, %p132
      %p134 = scmp.ne.s32.totalorder %s120, %s121
      %p135 = scmp.eq.s32.totalorder %s31, 1
      %p136 = por %p134, %p135
      %p138 = scmp.ne.s32.totalorder %s121, %s137
      %p139 = scmp.eq.s32.totalorder %s31, 0
      %p140 = por %p138, %p139
      %s141 = ssub.s32 %s32, %s44
      %p142 = scmp.eq.s32.totalorder %s141, 0
      %s144 = sadd.s32 %s143, 1
      %s145 = scalar_select %p142, %s143, %s144
      %p148 = pneg %p142
      %p149 = scmp.eq.s32.totalorder %s25, 1
      %p150 = por %p148, %p149
      %p151 = scmp.ne.s32.totalorder %s143, %s146
      %p152 = scmp.eq.s32.totalorder %s25, 0
      %p153 = por %p151, %p152
      %p154 = scmp.ne.s32.totalorder %s143, %s146
      %p155 = scmp.eq.s32.totalorder %s30, 1
      %p156 = por %p154, %p155
      %p157 = scmp.ne.s32.totalorder %s146, %s147
      %p158 = scmp.eq.s32.totalorder %s30, 0
      %p159 = por %p157, %p158
      %p160 = scmp.ne.s32.totalorder %s146, %s147
      %p161 = scmp.eq.s32.totalorder %s31, 1
      %p162 = por %p160, %p161
      %p164 = scmp.ne.s32.totalorder %s147, %s163
      %p165 = scmp.eq.s32.totalorder %s31, 0
      %p166 = por %p164, %p165
      %s167 = ssub.s32 %s32, %s44
      %p168 = scmp.eq.s32.totalorder %s167, 0
      %s170 = sadd.s32 %s169, 1
      %s171 = scalar_select %p168, %s169, %s170
      %p174 = pneg %p168
      %p175 = scmp.eq.s32.totalorder %s25, 1
      %p176 = por %p174, %p175
      %p177 = scmp.ne.s32.totalorder %s169, %s172
      %p178 = scmp.eq.s32.totalorder %s25, 0
      %p179 = por %p177, %p178
      %p180 = scmp.ne.s32.totalorder %s169, %s172
      %p181 = scmp.eq.s32.totalorder %s30, 1
      %p182 = por %p180, %p181
      %p183 = scmp.ne.s32.totalorder %s172, %s173
      %p184 = scmp.eq.s32.totalorder %s30, 0
      %p185 = por %p183, %p184
      %p186 = scmp.ne.s32.totalorder %s172, %s173
      %p187 = scmp.eq.s32.totalorder %s31, 1
      %p188 = por %p186, %p187
      %p190 = scmp.ne.s32.totalorder %s173, %s189
      %p191 = scmp.eq.s32.totalorder %s31, 0
      %p192 = por %p190, %p191
      %s193 = ssub.s32 %s32, %s44
      %p194 = scmp.eq.s32.totalorder %s193, 0
      %s196 = sadd.s32 %s195, 1
      %s197 = scalar_select %p194, %s195, %s196
      %p200 = pneg %p194
      %p201 = scmp.eq.s32.totalorder %s25, 1
      %p202 = por %p200, %p201
      %p203 = scmp.ne.s32.totalorder %s195, %s198
      %p204 = scmp.eq.s32.totalorder %s25, 0
      %p205 = por %p203, %p204
      %p206 = scmp.ne.s32.totalorder %s195, %s198
      %p207 = scmp.eq.s32.totalorder %s30, 1
      %p208 = por %p206, %p207
      %p209 = scmp.ne.s32.totalorder %s198, %s199
      %p210 = scmp.eq.s32.totalorder %s30, 0
      %p211 = por %p209, %p210
      %p212 = scmp.ne.s32.totalorder %s198, %s199
      %p213 = scmp.eq.s32.totalorder %s31, 1
      %p214 = por %p212, %p213
      %p216 = scmp.ne.s32.totalorder %s199, %s215
      %p217 = scmp.eq.s32.totalorder %s31, 0
      %p218 = por %p216, %p217
      %s219 = ssub.s32 %s32, %s44
      %p220 = scmp.eq.s32.totalorder %s219, 0
      %s222 = sadd.s32 %s221, 1
      %s223 = scalar_select %p220, %s221, %s222
      %p226 = pneg %p220
      %p227 = scmp.eq.s32.totalorder %s25, 1
      %p228 = por %p226, %p227
      %p229 = scmp.ne.s32.totalorder %s221, %s224
      %p230 = scmp.eq.s32.totalorder %s25, 0
      %p231 = por %p229, %p230
      %p232 = scmp.ne.s32.totalorder %s221, %s224
      %p233 = scmp.eq.s32.totalorder %s30, 1
      %p234 = por %p232, %p233
      %p235 = scmp.ne.s32.totalorder %s224, %s225
      %p236 = scmp.eq.s32.totalorder %s30, 0
      %p237 = por %p235, %p236
      %p238 = scmp.ne.s32.totalorder %s224, %s225
      %p239 = scmp.eq.s32.totalorder %s31, 1
      %p240 = por %p238, %p239
      %p242 = scmp.ne.s32.totalorder %s225, %s241
      %p243 = scmp.eq.s32.totalorder %s31, 0
      %p244 = por %p242, %p243
      %s245 = ssub.s32 %s33, %s40
      %s246 = ssub.s32 %s32, %s44
      %s247 = sor.u32 %s245, %s246
      %p248 = scmp.eq.s32.totalorder %s247, 0
      %s250 = sadd.s32 %s249, 1
      %s251 = scalar_select %p248, %s249, %s250
      %p254 = pneg %p248
      %p255 = scmp.eq.s32.totalorder %s25, 1
      %p256 = por %p254, %p255
      %p257 = scmp.ne.s32.totalorder %s249, %s252
      %p258 = scmp.eq.s32.totalorder %s25, 0
      %p259 = por %p257, %p258
      %p260 = scmp.ne.s32.totalorder %s249, %s252
      %p261 = scmp.eq.s32.totalorder %s30, 1
      %p262 = por %p260, %p261
      %p263 = scmp.ne.s32.totalorder %s252, %s253
      %p264 = scmp.eq.s32.totalorder %s30, 0
      %p265 = por %p263, %p264
      %p266 = scmp.ne.s32.totalorder %s252, %s253
      %p267 = scmp.eq.s32.totalorder %s31, 1
      %p268 = por %p266, %p267
      %p270 = scmp.ne.s32.totalorder %s253, %s269
      %p271 = scmp.eq.s32.totalorder %s31, 0
      %p272 = por %p270, %p271
      %p273 = scmp.le.s32.totalorder 1, %s25
      %p274 = scmp.lt.s32.totalorder %s25, 3
      %p275 = pnand %p273, %p274
      %p276 = pneg %p275
      // Predicated region
      $region9: #{tpu_custom_call.1} parent=5 // pred_check
        _
      $region10: #{tpu_custom_call.1} parent=5 // pred_check_branch
        %278 = sbr.rel (%p275) target = $region12
      $region11: #{tpu_custom_call.1} parent=5 // pred_region
        %s279 = ssub.s32 %s25, 1
        // Predicated region
        $region13: #{tpu_custom_call.1} parent=11 // pred_check
          %p280 = pneg %p58
        $region14: #{tpu_custom_call.1} parent=11 // pred_check_branch
          %282 = sbr.rel (%p280) target = $region16
        $region15: #{tpu_custom_call.1} parent=11 // pred_region
          _
        $region16: #{tpu_custom_call.1} parent=11 // pred_fallthru
          _
        // Predicated region
        $region17: #{tpu_custom_call.1} parent=11 // pred_check
          %p283 = pneg %p79
        $region18: #{tpu_custom_call.1} parent=11 // pred_check_branch
          %285 = sbr.rel (%p283) target = $region20
        $region19: #{tpu_custom_call.1} parent=11 // pred_region
          _
        $region20: #{tpu_custom_call.1} parent=11 // pred_fallthru
          _
      $region12: #{tpu_custom_call.1} parent=5 // pred_fallthru
        _
      %p286 = scmp.lt.s32.totalorder %s25, 2
      // Predicated region
      $region21: #{tpu_custom_call.1} parent=5 // pred_check
        %p287 = pneg %p286
      $region22: #{tpu_custom_call.1} parent=5 // pred_check_branch
        %289 = sbr.rel (%p287) target = $region24
      $region23: #{tpu_custom_call.1} parent=5 // pred_region
        // Predicated region
        $region25: #{tpu_custom_call.1} parent=23 // pred_check
          %p290 = pneg %p101
        $region26: #{tpu_custom_call.1} parent=23 // pred_check_branch
          %292 = sbr.rel (%p290) target = $region28
        $region27: #{tpu_custom_call.1} parent=23 // pred_region
          %s293 = sand.u32 %s91, 1
          %s294 = scalar_lea.sflag [#allocation5], %s293
          %s295 = sand.u32 %s91, 1
          %s296 = smul.addr %s295, 8
          %s297 = scalar_lea.vmem [#allocation4], %s296
          %s299 = ssub.s32 128, 128
          %300 = vsyncadd %s294, %s299
          %s301 = smul.addr %s33, 2
          %s302 = sadd.s32 %s32, %s301
          %s303 = smul.addr %s302, 128
          %s304 = scalar_lea.hbm %s2, %s303
          %s306 = sshll.u32 %s297, 4
          %s307 = int_to_ptr.vmem [resolvable:$true] %s306
          %309 = dma.hbm_to_vmem [thread:$0]  %s304, 128, %s307, %s294
        $region28: #{tpu_custom_call.1} parent=23 // pred_fallthru
          _
        // Predicated region
        $region29: #{tpu_custom_call.1} parent=23 // pred_check
          %p310 = pneg %p127
        $region30: #{tpu_custom_call.1} parent=23 // pred_check_branch
          %312 = sbr.rel (%p310) target = $region32
        $region31: #{tpu_custom_call.1} parent=23 // pred_region
          %s313 = sand.u32 %s117, 1
          %s314 = scalar_lea.sflag [#allocation8], %s313
          %s315 = sand.u32 %s117, 1
          %s316 = smul.addr %s315, 128
          %s317 = scalar_lea.vmem [#allocation7], %s316
          %s319 = ssub.s32 2048, 2048
          %320 = vsyncadd %s314, %s319
          %s321 = smul.addr %s32, 16
          %s322 = smul.addr %s321, 128
          %s323 = scalar_lea.hbm %s3, %s322
          %s324 = sshll.u32 %s317, 4
          %s325 = int_to_ptr.vmem [resolvable:$true] %s324
          %330 = dma.hbm_to_vmem [thread:$0]  %s323, 2048, %s325, %s314, 128, 128, 8
        $region32: #{tpu_custom_call.1} parent=23 // pred_fallthru
          _
        // Predicated region
        $region33: #{tpu_custom_call.1} parent=23 // pred_check
          %p331 = pneg %p153
        $region34: #{tpu_custom_call.1} parent=23 // pred_check_branch
          %333 = sbr.rel (%p331) target = $region36
        $region35: #{tpu_custom_call.1} parent=23 // pred_region
          %p334 = scmp.lt.s32.totalorder %s32, 1
          %s335 = scalar_select %p334, %s32, 1
          %s336 = scalar_lea.vmem %s4, %s335
        $region36: #{tpu_custom_call.1} parent=23 // pred_fallthru
          _
        // Predicated region
        $region37: #{tpu_custom_call.1} parent=23 // pred_check
          %p337 = pneg %p179
        $region38: #{tpu_custom_call.1} parent=23 // pred_check_branch
          %339 = sbr.rel (%p337) target = $region40
        $region39: #{tpu_custom_call.1} parent=23 // pred_region
          %p340 = scmp.lt.s32.totalorder %s32, 1
          %s341 = scalar_select %p340, %s32, 1
          %s342 = scalar_lea.vmem %s5, %s341
        $region40: #{tpu_custom_call.1} parent=23 // pred_fallthru
          _
        // Predicated region
        $region41: #{tpu_custom_call.1} parent=23 // pred_check
          %p343 = pneg %p205
        $region42: #{tpu_custom_call.1} parent=23 // pred_check_branch
          %345 = sbr.rel (%p343) target = $region44
        $region43: #{tpu_custom_call.1} parent=23 // pred_region
          %p346 = scmp.lt.s32.totalorder %s32, 1
          %s347 = scalar_select %p346, %s32, 1
          %s348 = scalar_lea.vmem %s6, %s347
        $region44: #{tpu_custom_call.1} parent=23 // pred_fallthru
          _
        // Predicated region
        $region45: #{tpu_custom_call.1} parent=23 // pred_check
          %p349 = pneg %p231
        $region46: #{tpu_custom_call.1} parent=23 // pred_check_branch
          %351 = sbr.rel (%p349) target = $region48
        $region47: #{tpu_custom_call.1} parent=23 // pred_region
          %p352 = scmp.lt.s32.totalorder %s32, 1
          %s353 = scalar_select %p352, %s32, 1
          %s354 = scalar_lea.vmem %s7, %s353
        $region48: #{tpu_custom_call.1} parent=23 // pred_fallthru
          _
      $region24: #{tpu_custom_call.1} parent=5 // pred_fallthru
        _
      %p355 = scmp.le.s32.totalorder 1, %s25
      %p356 = scmp.lt.s32.totalorder %s25, 3
      %p357 = pnand %p355, %p356
      %p358 = pneg %p357
      // Predicated region
      $region49: #{tpu_custom_call.1} parent=5 // pred_check
        _
      $region50: #{tpu_custom_call.1} parent=5 // pred_check_branch
        %360 = sbr.rel (%p357) target = $region52
      $region51: #{tpu_custom_call.1} parent=5 // pred_region
        %s361 = ssub.s32 %s25, 1
        %s362 = sand.u32 %s94, 1
        %s363 = scalar_lea.sflag [#allocation5], %s362
        %s364 = sand.u32 %s94, 1
        %s365 = smul.addr %s364, 8
        %s366 = scalar_lea.vmem [#allocation4], %s365
        // Predicated region
        $region53: #{tpu_custom_call.1} parent=51 // pred_check
          %p367 = pneg %p107
        $region54: #{tpu_custom_call.1} parent=51 // pred_check_branch
          %369 = sbr.rel (%p367) target = $region56
        $region55: #{tpu_custom_call.1} parent=51 // pred_region
          %370 = dma.done %s363, 128
        $region56: #{tpu_custom_call.1} parent=51 // pred_fallthru
          _
        %s371 = sand.u32 %s120, 1
        %s372 = scalar_lea.sflag [#allocation8], %s371
        %s373 = sand.u32 %s120, 1
        %s374 = smul.addr %s373, 128
        %s375 = scalar_lea.vmem [#allocation7], %s374
        // Predicated region
        $region57: #{tpu_custom_call.1} parent=51 // pred_check
          %p376 = pneg %p133
        $region58: #{tpu_custom_call.1} parent=51 // pred_check_branch
          %378 = sbr.rel (%p376) target = $region60
        $region59: #{tpu_custom_call.1} parent=51 // pred_region
          %379 = dma.done %s372, 2048
        $region60: #{tpu_custom_call.1} parent=51 // pred_fallthru
          _
        %p380 = pneg %p58
        %p381 = pneg %p55
        %p382 = pneg %p79
        %p383 = pneg %p76
        %s384 = sand.u32 %s94, 1
        %s385 = scalar_lea.sflag [#allocation5], %s384
        %s386 = sand.u32 %s94, 1
        %s387 = smul.addr %s386, 8
        %s388 = scalar_lea.vmem [#allocation4], %s387
        %p389 = pneg %p107
        %p390 = pneg %p104
        %s391 = sand.u32 %s120, 1
        %s392 = scalar_lea.sflag [#allocation8], %s391
        %s393 = sand.u32 %s120, 1
        %s394 = smul.addr %s393, 128
        %s395 = scalar_lea.vmem [#allocation7], %s394
        %p396 = pneg %p133
        %p397 = pneg %p130
        %p398 = scmp.lt.s32.totalorder %s34, 1
        %s399 = scalar_select %p398, %s34, 1
        %s400 = scalar_lea.vmem %s4, %s399
        %p401 = pneg %p159
        %p402 = pneg %p156
        %p403 = scmp.lt.s32.totalorder %s34, 1
        %s404 = scalar_select %p403, %s34, 1
        %s405 = scalar_lea.vmem %s5, %s404
        %p406 = pneg %p185
        %p407 = pneg %p182
        %p408 = scmp.lt.s32.totalorder %s34, 1
        %s409 = scalar_select %p408, %s34, 1
        %s410 = scalar_lea.vmem %s6, %s409
        %p411 = pneg %p211
        %p412 = pneg %p208
        %p413 = scmp.lt.s32.totalorder %s34, 1
        %s414 = scalar_select %p413, %s34, 1
        %s415 = scalar_lea.vmem %s7, %s414
        %p416 = pneg %p237
        %p417 = pneg %p234
        %p418 = pneg %p265
        %p419 = pneg %p262
        %s420 = sand.u32 %s252, 1
        %s421 = scalar_lea.sflag [#allocation6], %s420
        %s422 = sand.u32 %s252, 1
        %s423 = smul.addr %s422, 8
        %s424 = scalar_lea.vmem [#allocation9], %s423
        %p425 = scmp.lt.s32.totalorder %s34, 1
        %s426 = scalar_select %p425, %s34, 1
        %s427 = scalar_lea.vmem %s4, %s426
        %p428 = scmp.lt.s32.totalorder %s34, 1
        %s429 = scalar_select %p428, %s34, 1
        %s430 = scalar_lea.vmem %s5, %s429
        %p431 = scmp.lt.s32.totalorder %s34, 1
        %s432 = scalar_select %p431, %s34, 1
        %s433 = scalar_lea.vmem %s6, %s432
        %p434 = scmp.lt.s32.totalorder %s34, 1
        %s435 = scalar_select %p434, %s34, 1
        %s436 = scalar_lea.vmem %s7, %s435
        %s437 = sld [smem:[#allocation2]]
        %s438 = sld [smem:[#allocation3]]
        %v439 = vld [vmem:[%s366] sm:$0xff]
        %v440 = vstv %s437
        %v441 = vmul.f32 %v439, %v440
        %v442 = vstv %s438
        %v443 = vadd.f32 %v441, %v442
        %v444 = vld [vmem:[%s375] sm:$0xff]
        %v445 = vld [vmem:[%s375 + $0x8] sm:$0xff]
        %v446 = vld [vmem:[%s375 + $0x10] sm:$0xff]
        %v447 = vld [vmem:[%s375 + $0x18] sm:$0xff]
        %v448 = vld [vmem:[%s375 + $0x20] sm:$0xff]
        %v449 = vld [vmem:[%s375 + $0x28] sm:$0xff]
        %v450 = vld [vmem:[%s375 + $0x30] sm:$0xff]
        %v451 = vld [vmem:[%s375 + $0x38] sm:$0xff]
        %v452 = vld [vmem:[%s375 + $0x40] sm:$0xff]
        %v453 = vld [vmem:[%s375 + $0x48] sm:$0xff]
        %v454 = vld [vmem:[%s375 + $0x50] sm:$0xff]
        %v455 = vld [vmem:[%s375 + $0x58] sm:$0xff]
        %v456 = vld [vmem:[%s375 + $0x60] sm:$0xff]
        %v457 = vld [vmem:[%s375 + $0x68] sm:$0xff]
        %v458 = vld [vmem:[%s375 + $0x70] sm:$0xff]
        %v459 = vld [vmem:[%s375 + $0x78] sm:$0xff]
        %v460 = vld [vmem:[%s427] sm:$0x1]
        %v462 = vlaneseq
        %v463 = vshrl.u32 %v462, 7
        %v464 = vsub.s32 0, %v463
        %v465 = vrot.slane %v460, %v464
        %467 = vmatprep.subr.mxu0 0.0
        %468 = vmatpush1.msra.mxu0 %v444
        %469 = vmatprep.subr.mxu0 0.0
        %470 = vmatpush1.msra.mxu0 %v445
        %471 = vmatprep.subr.mxu0 0.0
        %472 = vmatpush1.msra.mxu0 %v446
        %473 = vmatprep.subr.mxu0 0.0
        %474 = vmatpush1.msra.mxu0 %v447
        %475 = vmatprep.subr.mxu0 0.0
        %476 = vmatpush1.msra.mxu0 %v448
        %477 = vmatprep.subr.mxu0 0.0
        %478 = vmatpush1.msra.mxu0 %v449
        %479 = vmatprep.subr.mxu0 0.0
        %480 = vmatpush1.msra.mxu0 %v450
        %481 = vmatprep.subr.mxu0 0.0
        %482 = vmatpush1.msra.mxu0 %v451
        %483 = vmatprep.subr.mxu0 0.0
        %484 = vmatpush1.msra.mxu0 %v452
        %485 = vmatprep.subr.mxu0 0.0
        %486 = vmatpush1.msra.mxu0 %v453
        %487 = vmatprep.subr.mxu0 0.0
        %488 = vmatpush1.msra.mxu0 %v454
        %489 = vmatprep.subr.mxu0 0.0
        %490 = vmatpush1.msra.mxu0 %v455
        %491 = vmatprep.subr.mxu0 0.0
        %492 = vmatpush1.msra.mxu0 %v456
        %493 = vmatprep.subr.mxu0 0.0
        %494 = vmatpush1.msra.mxu0 %v457
        %495 = vmatprep.subr.mxu0 0.0
        %496 = vmatpush1.msra.mxu0 %v458
        %497 = vmatprep.subr.mxu0 0.0
        %498 = vmatpush1.msra.mxu0 %v459
        %499 = vmatprep.subr.mxu0 0.0
        %500 = vmatpush1.msra.mxu0 0.0
        %501 = vmatprep.subr.mxu0 0.0
        %502 = vmatpush1.msra.mxu0 0.0
        %503 = vmatprep.subr.mxu0 0.0
        %504 = vmatpush1.msra.mxu0 0.0
        %505 = vmatprep.subr.mxu0 0.0
        %506 = vmatpush1.msra.mxu0 0.0
        %507 = vmatprep.subr.mxu0 0.0
        %508 = vmatpush1.msra.mxu0 0.0
        %509 = vmatprep.subr.mxu0 0.0
        %510 = vmatpush1.msra.mxu0 0.0
        %511 = vmatprep.subr.mxu0 0.0
        %512 = vmatpush1.msra.mxu0 0.0
        %513 = vmatprep.subr.mxu0 0.0
        %514 = vmatpush1.msra.mxu0 0.0
        %515 = vmatprep.subr.mxu0 0.0
        %516 = vmatpush1.msra.mxu0 0.0
        %517 = vmatprep.subr.mxu0 0.0
        %518 = vmatpush1.msra.mxu0 0.0
        %519 = vmatprep.subr.mxu0 0.0
        %520 = vmatpush1.msra.mxu0 0.0
        %521 = vmatprep.subr.mxu0 0.0
        %522 = vmatpush1.msra.mxu0 0.0
        %523 = vmatprep.subr.mxu0 0.0
        %524 = vmatpush1.msra.mxu0 0.0
        %525 = vmatprep.subr.mxu0 0.0
        %526 = vmatpush1.msra.mxu0 0.0
        %527 = vmatprep.subr.mxu0 0.0
        %528 = vmatpush1.msra.mxu0 0.0
        %529 = vmatprep.subr.mxu0 0.0
        %530 = vmatpush1.msra.mxu0 0.0
        %531 = vmatprep.mubr.f32.mxu0 0.0
        %532 = vmatmul.mubr.f32.gmra.mrb[0].mxu0 %v443
        %v533 = vpop.f32.mrb[0].mxu0
        %v534 = vadd.f32 %v465, %v533
        %v535 = vpop.f32.mrb[0].mxu0
        %536 = vdwg.mxu0
        %v537 = vld [vmem:[%s430] sm:$0x1]
        %v539 = vlaneseq
        %v540 = vshrl.u32 %v539, 7
        %v541 = vsub.s32 0, %v540
        %v542 = vrot.slane %v537, %v541
        %v544 = vmul.f32 %v542, %v534
        %v545 = vxor.u32 %v544, 2147483648
        %v546 = vmul.f32 %v545, 1.442695
        %v547 = vpow.pop %v546
        %v548 = vadd.f32 %v547, 1.0
        %v549 = vrcp.pop %v548
        %v550 = vmul.f32 1.0, %v549
        %v551 = vld [vmem:[%s433] sm:$0x1]
        %v552 = vld [vmem:[%s436] sm:$0x1]
        %v554 = vlaneseq
        %v555 = vshrl.u32 %v554, 7
        %v556 = vsub.s32 0, %v555
        %v557 = vrot.slane %v552, %v556
        %v559 = vmul.f32 %v550, %v557
        %v561 = vlaneseq
        %v562 = vshrl.u32 %v561, 7
        %v563 = vsub.s32 0, %v562
        %v564 = vrot.slane %v551, %v563
        %v566 = vadd.f32 %v564, %v559
        %v567 = vmul.f32 %v566, %v534
        %v568 = vadd.f32 %v567, %v439
        %569 = vst [vmem:[%s424] sm:$0xff] %v568
        %s570 = sand.u32 %s252, 1
        %s571 = scalar_lea.sflag [#allocation6], %s570
        %s572 = sand.u32 %s252, 1
        %s573 = smul.addr %s572, 8
        %s574 = scalar_lea.vmem [#allocation9], %s573
        // Predicated region
        $region61: #{tpu_custom_call.1} parent=51 // pred_check
          %p575 = pneg %p262
        $region62: #{tpu_custom_call.1} parent=51 // pred_check_branch
          %577 = sbr.rel (%p575) target = $region64
        $region63: #{tpu_custom_call.1} parent=51 // pred_region
          %s579 = ssub.s32 128, 128
          %580 = vsyncadd %s571, %s579
          %s581 = smul.addr %s35, 2
          %s582 = sadd.s32 %s34, %s581
          %s583 = smul.addr %s582, 128
          %s584 = scalar_lea.hbm %s8, %s583
          %s586 = sshll.u32 %s574, 4
          %s587 = int_to_ptr.vmem [resolvable:$true] %s586
          %589 = dma.vmem_to_hbm [thread:$0]  %s587, 128, %s584, %s571
        $region64: #{tpu_custom_call.1} parent=51 // pred_fallthru
          _
      $region52: #{tpu_custom_call.1} parent=5 // pred_fallthru
        _
      %p590 = scmp.le.s32.totalorder 2, %s25
      // Predicated region
      $region65: #{tpu_custom_call.1} parent=5 // pred_check
        %p591 = pneg %p590
      $region66: #{tpu_custom_call.1} parent=5 // pred_check_branch
        %593 = sbr.rel (%p591) target = $region68
      $region67: #{tpu_custom_call.1} parent=5 // pred_region
        %s594 = ssub.s32 %s25, 2
        // Predicated region
        $region69: #{tpu_custom_call.1} parent=67 // pred_check
          %p595 = pneg %p268
        $region70: #{tpu_custom_call.1} parent=67 // pred_check_branch
          %597 = sbr.rel (%p595) target = $region72
        $region71: #{tpu_custom_call.1} parent=67 // pred_region
          %s598 = sand.u32 %s253, 1
          %s599 = scalar_lea.sflag [#allocation6], %s598
          %s600 = sand.u32 %s253, 1
          %s601 = smul.addr %s600, 8
          %s602 = scalar_lea.vmem [#allocation9], %s601
          %603 = dma.done %s599, 128
        $region72: #{tpu_custom_call.1} parent=67 // pred_fallthru
          _
      $region68: #{tpu_custom_call.1} parent=5 // pred_fallthru
        _
    $region6: #{tpu_custom_call.1} parent=1 // loop_footer
      %s29 = sadd.s32 1, %s25
    $region7: #{tpu_custom_call.1} parent=1 // loop_footer_branch
      %24 = sbr.rel target = $region3
    $region8: #{tpu_custom_call.1} parent=1 // loop_exit
      _
    %604 = vsyncpa [#allocation5], 1
    %s605 = scalar_lea.sflag [#allocation5], 1
    %606 = vsyncpa %s605, 1
    %607 = vsyncpa [#allocation8], 1
    %s608 = scalar_lea.sflag [#allocation8], 1
    %609 = vsyncpa %s608, 1
    %610 = vsyncpa [#allocation6], 1
    %s611 = scalar_lea.sflag [#allocation6], 1
    %612 = vsyncpa %s611, 1

</llo_original>
